<compile_context>
chip_gen: v5e
topology: v5e:2x2
jax: 0.10.0
libtpu: 0.0.40
codegen_flags: <defaults>
</compile_context>

<pallas_src>
import functools

import jax
import jax.numpy as jnp
from jax import lax
from jax.experimental import pallas as pl
from jax.experimental.pallas import tpu as pltpu

BN_EPS = 1e-5
LEAKY_SLOPE = 0.01        # nn.LeakyReLU default negative_slope
OUT_PAD = 128             # pad the 5-way head to a lane-dense 128-wide output
NEG_BIG = -1e30           # "minus infinity" for padded logit lanes -> exp == 0


def cnn_lstm_kernel(emb_ref, conv_w_ref, conv_b_ref,
                    w_ih_ref, w_hh_ref, b_lstm_ref,
                    fc1_w_ref, fc1_b_ref, fc2_w_ref, fc2_b_ref,
                    out_ref, xp_ref, *, hid, t_out, bt, unroll):
    to_bt = t_out * bt

    # ---- Conv1d(H -> 2H, k=3) + ReLU as ONE im2col matmul -------------------
    # emb_ref[0] is a time-major slab: row (t*bt + b) = token t of batch b, so
    # tap k of the conv is a bt*k row shift; concatenating the three shifted
    # views along lanes gives the im2col slab for one [To*Bt,3H]@[3H,2H] matmul.
    x = emb_ref[0]                                            # (T*Bt, H) bf16
    x_im2col = jnp.concatenate(
        [x[0:to_bt], x[bt:bt + to_bt], x[2 * bt:2 * bt + to_bt]], axis=-1)
    acc = jnp.dot(x_im2col, conv_w_ref[...],
                  preferred_element_type=jnp.float32)         # (To*Bt, 2H) f32
    conv = jnp.maximum(acc + conv_b_ref[...], 0.0)            # ReLU (af11)

    # ---- LSTM input projection for all timesteps (one big matmul, bf16 store)
    xp_ref[...] = jnp.dot(conv.astype(jnp.bfloat16), w_ih_ref[...],
                          preferred_element_type=jnp.float32
                          ).astype(jnp.bfloat16)              # (To*Bt, 4H) bf16

    # ---- LSTM recurrence: h (bf16), c (f32) stay in vregs --------------------
    # Gate columns were permuted in the wrapper to [i, f, o | g].
    w_hh = w_hh_ref[...]                                      # (H, 4H) bf16
    b_lstm = jnp.broadcast_to(b_lstm_ref[...], (bt, 4 * hid)) # hoisted broadcast

    def step(t, carry):
        h, c = carry
        off = pl.multiple_of(t * bt, bt)
        gates = (jnp.dot(h, w_hh, preferred_element_type=jnp.float32)
                 + b_lstm + xp_ref[pl.ds(off, bt), :])        # f32
        sig = jax.nn.sigmoid(gates[:, :3 * hid])              # one wide EUP op
        i_g = sig[:, 0 * hid:1 * hid]
        f_g = sig[:, 1 * hid:2 * hid]
        o_g = sig[:, 2 * hid:3 * hid]
        g_g = jnp.tanh(gates[:, 3 * hid:])
        c = f_g * c + i_g * g_g
        h = (o_g * jnp.tanh(c)).astype(jnp.bfloat16)
        return h, c

    h0 = jnp.zeros((bt, hid), jnp.bfloat16)
    c0 = jnp.zeros((bt, hid), jnp.float32)
    h_n, _ = lax.fori_loop(0, t_out, step, (h0, c0), unroll=unroll)

    # Dropout(p=0.25) is identity in eval mode.  ReLU (af12):
    h_n = jnp.maximum(h_n, 0)                                 # bf16

    # ---- final_predictor: Linear(+folded BN) -> LeakyReLU -> Linear -> Softmax
    z = jnp.dot(h_n, fc1_w_ref[...],
                preferred_element_type=jnp.float32) + fc1_b_ref[...]
    z = jnp.where(z > 0.0, z, LEAKY_SLOPE * z)
    logits = jnp.dot(z.astype(jnp.bfloat16), fc2_w_ref[...],
                     preferred_element_type=jnp.float32) + fc2_b_ref[...]

    m = jnp.max(logits, axis=-1, keepdims=True)
    e = jnp.exp(logits - m)                    # padded lanes: exp(-1e30) == 0
    # Exact divide (runs once per tile) -> probabilities sum to 1 exactly.
    out_ref[...] = e / jnp.sum(e, axis=-1, keepdims=True)


def prepare_params(params):
    """One-time parameter preprocessing (plain JAX, outside the kernel)."""
    hid = params["fc1_w"].shape[0]

    # LSTM gate columns: PyTorch order (i, f, g, o) -> (i, f, o, g).
    perm = jnp.concatenate([jnp.arange(0, hid),
                            jnp.arange(hid, 2 * hid),
                            jnp.arange(3 * hid, 4 * hid),
                            jnp.arange(2 * hid, 3 * hid)])

    # Fold eval-mode BatchNorm1d into the first Linear (affine-in-affine).
    scale = params["bn_g"] * jax.lax.rsqrt(params["bn_v"] + BN_EPS)
    fc1_w = (params["fc1_w"] * scale).astype(jnp.bfloat16)
    fc1_b = (params["fc1_b"] - params["bn_m"]) * scale + params["bn_b"]

    # Pad the 5-way head to 128 lanes; padded logit lanes get a huge negative
    # bias (kept in f32!) so their softmax weight is exactly zero.
    fc2_w = jnp.pad(params["fc2_w"], ((0, 0), (0, OUT_PAD - 5))).astype(jnp.bfloat16)
    fc2_b = jnp.concatenate(
        [params["fc2_b"], jnp.full((1, OUT_PAD - 5), NEG_BIG, jnp.float32)],
        axis=-1)

    return {
        "embedding": params["embedding"].astype(jnp.bfloat16),
        # Conv1d weight (3, H, 2H) -> im2col layout (3H, 2H), tap-major rows.
        "conv_w": params["conv_w"].reshape(3 * hid, 2 * hid).astype(jnp.bfloat16),
        "conv_b": params["conv_b"],                               # f32
        "w_ih": params["w_ih"][:, perm].astype(jnp.bfloat16),
        "w_hh": params["w_hh"][:, perm].astype(jnp.bfloat16),
        "b_lstm": params["b_lstm"][:, perm],                      # f32 (b_ih+b_hh)
        "fc1_w": fc1_w, "fc1_b": fc1_b,
        "fc2_w": fc2_w, "fc2_b": fc2_b,
    }


def _round_up(x, m):
    return -(-x // m) * m


def _pick_batch_tile(B, T, hid):
    """Largest batch tile (multiple of 16) that fits a conservative VMEM budget,
    capped so the parallel grid has >= 2 steps when the batch allows (v7x)."""
    t_out = T - 2
    per_elem = (2 * T * hid * 2            # emb slab (bf16, double buffered)
                + t_out * 4 * hid * 2      # xp scratch (bf16)
                + t_out * 2 * hid * 4      # f32 conv temporary
                + t_out * 3 * hid * 2)     # bf16 im2col temporary
    budget = 24 << 20                      # leaves ample headroom on v7x (64 MiB)
    bt = max(16, min(256, (budget // max(per_elem, 1)) // 16 * 16))
    b_ceil = _round_up(B, 16)
    if b_ceil >= 32:                       # keep >= 2 grid steps for 2 TCs
        bt = min(bt, _round_up(b_ceil // 2, 16))
    return min(bt, b_ceil)


def cnn_lstm_forward(tokens, prep, *, batch_tile=None):
    """tokens: (B, T) int32.  Returns softmax probabilities of shape (B, 5)
    (or (5,) for B == 1, matching the PyTorch trailing .squeeze())."""
    B, T = tokens.shape
    hid = prep["fc1_w"].shape[0]
    t_out = T - 2                                  # Conv1d k=3, no padding
    assert t_out >= 1

    bt = batch_tile if batch_tile is not None else _pick_batch_tile(B, T, hid)
    assert bt % 16 == 0, "batch tile must be a multiple of 16 (bf16 sublanes)"
    nb = -(-B // bt)                               # number of batch tiles
    b_pad = nb * bt

    tok = tokens
    if b_pad != B:
        tok = jnp.pad(tokens, ((0, b_pad - B), (0, 0)))

    # Embedding gather (plain-JAX glue) + rearrangement into per-tile,
    # time-major slabs: slab[i, t*bt + b, :] = embedding[tok[i*bt + b, t]].
    tok_r = tok.reshape(nb, bt, T).transpose(0, 2, 1)          # (nb, T, bt)
    emb = prep["embedding"][tok_r].reshape(nb, T * bt, hid)    # bf16

    unroll = max(1, min(t_out, 8))
    kernel = functools.partial(cnn_lstm_kernel, hid=hid, t_out=t_out, bt=bt,
                               unroll=unroll)

    # Explicit VMEM budget derived from the actual buffer sizes.
    weight_bytes = sum(int(v.size) * v.dtype.itemsize
                       for k, v in prep.items() if k != "embedding")
    vmem_bytes = (2 * T * bt * hid * 2             # emb slab, double buffered
                  + t_out * bt * 4 * hid * 2       # xp scratch (bf16)
                  + t_out * bt * 2 * hid * 4       # f32 conv temporary
                  + t_out * bt * 3 * hid * 2       # bf16 im2col temporary
                  + 2 * bt * OUT_PAD * 4           # output, double buffered
                  + 2 * weight_bytes)              # weights (double buffered)
    vmem_limit = int(min(max(2 * vmem_bytes, 32 << 20), 56 << 20))

    grid_spec = pltpu.PrefetchScalarGridSpec(
        num_scalar_prefetch=0,
        grid=(nb,),
        in_specs=[
            pl.BlockSpec((1, T * bt, hid), lambda i: (i, 0, 0)),     # emb slab
            # Grid-invariant weights (constant index_map across the grid):
            pl.BlockSpec((3 * hid, 2 * hid), lambda i: (0, 0)),      # conv_w
            pl.BlockSpec((1, 2 * hid), lambda i: (0, 0)),            # conv_b
            pl.BlockSpec((2 * hid, 4 * hid), lambda i: (0, 0)),      # w_ih
            pl.BlockSpec((hid, 4 * hid), lambda i: (0, 0)),          # w_hh
            pl.BlockSpec((1, 4 * hid), lambda i: (0, 0)),            # b_lstm
            pl.BlockSpec((hid, hid), lambda i: (0, 0)),              # fc1_w (+BN)
            pl.BlockSpec((1, hid), lambda i: (0, 0)),                # fc1_b
            pl.BlockSpec((hid, OUT_PAD), lambda i: (0, 0)),          # fc2_w (pad)
            pl.BlockSpec((1, OUT_PAD), lambda i: (0, 0)),            # fc2_b (pad)
        ],
        out_specs=pl.BlockSpec((bt, OUT_PAD), lambda i: (i, 0)),
        scratch_shapes=[pltpu.VMEM((t_out * bt, 4 * hid), jnp.bfloat16)],
    )

    out = pl.pallas_call(
        kernel,
        out_shape=jax.ShapeDtypeStruct((b_pad, OUT_PAD), jnp.float32),
        grid_spec=grid_spec,
        compiler_params=pltpu.CompilerParams(
            dimension_semantics=("parallel",),     # batch tiles shard across TCs
            vmem_limit_bytes=vmem_limit),
    )(emb, prep["conv_w"], prep["conv_b"], prep["w_ih"], prep["w_hh"],
      prep["b_lstm"], prep["fc1_w"], prep["fc1_b"], prep["fc2_w"], prep["fc2_b"])

    probs = out[:B, :5]
    return probs[0] if B == 1 else probs           # mirror PyTorch .squeeze()


def reference_forward(tokens, params):
    """Pure-JAX f32 reference of CNNLSTMPredictorV1.forward (eval mode)."""
    emb = params["embedding"][tokens]                        # (B, T, H)
    B, T, hid = emb.shape
    t_out = T - 2
    conv = (jnp.einsum("btc,cd->btd", emb[:, 0:t_out], params["conv_w"][0])
            + jnp.einsum("btc,cd->btd", emb[:, 1:t_out + 1], params["conv_w"][1])
            + jnp.einsum("btc,cd->btd", emb[:, 2:t_out + 2], params["conv_w"][2])
            + params["conv_b"])
    conv = jnp.maximum(conv, 0.0)                            # (B, To, 2H)

    def step(carry, x_t):                                    # PyTorch gates i,f,g,o
        h, c = carry
        gates = x_t @ params["w_ih"] + h @ params["w_hh"] + params["b_lstm"][0]
        i = jax.nn.sigmoid(gates[:, 0 * hid:1 * hid])
        f = jax.nn.sigmoid(gates[:, 1 * hid:2 * hid])
        g = jnp.tanh(gates[:, 2 * hid:3 * hid])
        o = jax.nn.sigmoid(gates[:, 3 * hid:4 * hid])
        c = f * c + i * g
        h = o * jnp.tanh(c)
        return (h, c), None

    h0 = jnp.zeros((B, hid), jnp.float32)
    c0 = jnp.zeros((B, hid), jnp.float32)
    (h_n, _), _ = lax.scan(step, (h0, c0), jnp.transpose(conv, (1, 0, 2)))

    h_n = jnp.maximum(h_n, 0.0)                              # dropout(eval)+ReLU
    z = h_n @ params["fc1_w"] + params["fc1_b"][0]
    scale = params["bn_g"][0] * jax.lax.rsqrt(params["bn_v"][0] + BN_EPS)
    z = (z - params["bn_m"][0]) * scale + params["bn_b"][0]
    z = jnp.where(z > 0.0, z, LEAKY_SLOPE * z)
    logits = z @ params["fc2_w"] + params["fc2_b"][0]
    probs = jax.nn.softmax(logits, axis=-1)
    return probs[0] if B == 1 else probs


def init_params(key, n_tokens, hid):
    """PyTorch-layout parameters (as if loaded from a checkpoint)."""
    ks = jax.random.split(key, 10)

    def u(k, shape, fan_in):
        s = (1.0 / fan_in) ** 0.5
        return jax.random.uniform(k, shape, jnp.float32, -s, s)

    return {
        # nn.Embedding(n_tokens, hid): N(0, 1)
        "embedding": jax.random.normal(ks[0], (n_tokens, hid), jnp.float32),
        # nn.Conv1d(hid, 2*hid, 3): PyTorch weight (2H, H, 3) -> here (3, H, 2H)
        "conv_w": u(ks[1], (3, hid, 2 * hid), hid * 3),
        "conv_b": u(ks[2], (1, 2 * hid), hid * 3),
        # nn.LSTM(2*hid, hid): weight_ih (4H, 2H) -> (2H, 4H); weight_hh -> (H, 4H)
        "w_ih": u(ks[3], (2 * hid, 4 * hid), hid),
        "w_hh": u(ks[4], (hid, 4 * hid), hid),
        "b_lstm": u(ks[5], (1, 4 * hid), hid),     # b_ih + b_hh combined
        # nn.Linear(hid, hid)
        "fc1_w": u(ks[6], (hid, hid), hid),
        "fc1_b": u(ks[7], (1, hid), hid),
        # nn.BatchNorm1d(hid) eval-mode stats / affine (fresh-module defaults)
        "bn_g": jnp.ones((1, hid), jnp.float32),
        "bn_b": jnp.zeros((1, hid), jnp.float32),
        "bn_m": jnp.zeros((1, hid), jnp.float32),
        "bn_v": jnp.ones((1, hid), jnp.float32),
        # nn.Linear(hid, 5)
        "fc2_w": u(ks[8], (hid, 5), hid),
        "fc2_b": u(ks[9], (1, 5), hid),
    }


if __name__ == "__main__":
    n_tokens, hid = 50, 32
    batch, seq = 4, 10

    key = jax.random.PRNGKey(0)
    k_params, k_tok = jax.random.split(key)
    params = init_params(k_params, n_tokens, hid)
    prep = prepare_params(params)
    tokens = jax.random.randint(k_tok, (batch, seq), 0, n_tokens, dtype=jnp.int32)

    probs = jax.block_until_ready(cnn_lstm_forward(tokens, prep))
    ref = reference_forward(tokens, params)

    assert probs.shape == (batch, 5)
    assert bool(jnp.all(jnp.isfinite(probs)))
    # Exact softmax divide -> rows sum to 1 up to f32 rounding.
    assert bool(jnp.allclose(jnp.sum(probs, axis=-1), 1.0, atol=1e-3))
    # bf16 weights/activations in the kernel vs f32 reference: loose tolerance.
    assert bool(jnp.allclose(probs, ref, atol=5e-2))
    print("KERNEL_OK")
</pallas_src>

<mosaic_0001>
module attributes {stable_mosaic.version = 11 : i64} {
  func.func @cnn_lstm_kernel(%arg0: i32, %arg1: memref<1x160x32xbf16, #tpu.memory_space<vmem>>, %arg2: memref<96x64xbf16, #tpu.memory_space<vmem>>, %arg3: memref<1x64xf32, #tpu.memory_space<vmem>>, %arg4: memref<64x128xbf16, #tpu.memory_space<vmem>>, %arg5: memref<32x128xbf16, #tpu.memory_space<vmem>>, %arg6: memref<1x128xf32, #tpu.memory_space<vmem>>, %arg7: memref<32x32xbf16, #tpu.memory_space<vmem>>, %arg8: memref<1x32xf32, #tpu.memory_space<vmem>>, %arg9: memref<32x128xbf16, #tpu.memory_space<vmem>>, %arg10: memref<1x128xf32, #tpu.memory_space<vmem>>, %arg11: memref<16x128xf32, #tpu.memory_space<vmem>>, %arg12: memref<128x128xbf16, #tpu.memory_space<vmem>>) attributes {dimension_semantics = [#tpu.dimension_semantics<parallel>], iteration_bounds = array<i64: 1>, scalar_prefetch = 0 : i64, scratch_operands = 1 : i64, tpu.core_type = #tpu.core_type<tc>, window_params = [{transform_indices = @transform_0, window_bounds = array<i64: 1, 160, 32>}, {pipeline_mode = #tpu.pipeline_mode<synchronous>, transform_indices = @transform_1, window_bounds = array<i64: 96, 64>}, {pipeline_mode = #tpu.pipeline_mode<synchronous>, transform_indices = @transform_2, window_bounds = array<i64: 1, 64>}, {pipeline_mode = #tpu.pipeline_mode<synchronous>, transform_indices = @transform_3, window_bounds = array<i64: 64, 128>}, {pipeline_mode = #tpu.pipeline_mode<synchronous>, transform_indices = @transform_4, window_bounds = array<i64: 32, 128>}, {pipeline_mode = #tpu.pipeline_mode<synchronous>, transform_indices = @transform_5, window_bounds = array<i64: 1, 128>}, {pipeline_mode = #tpu.pipeline_mode<synchronous>, transform_indices = @transform_6, window_bounds = array<i64: 32, 32>}, {pipeline_mode = #tpu.pipeline_mode<synchronous>, transform_indices = @transform_7, window_bounds = array<i64: 1, 32>}, {pipeline_mode = #tpu.pipeline_mode<synchronous>, transform_indices = @transform_8, window_bounds = array<i64: 32, 128>}, {pipeline_mode = #tpu.pipeline_mode<synchronous>, transform_indices = @transform_9, window_bounds = array<i64: 1, 128>}, {transform_indices = @transform_10, window_bounds = array<i64: 16, 128>}]} {
    %c0 = arith.constant 0 : index
    %c0_0 = arith.constant 0 : index
    %c0_1 = arith.constant 0 : index
    %0 = vector.load %arg1[%c0, %c0_0, %c0_1] : memref<1x160x32xbf16, #tpu.memory_space<vmem>>, vector<1x160x32xbf16>
    %1 = vector.shape_cast %0 : vector<1x160x32xbf16> to vector<160x32xbf16>
    %2 = vector.extract_strided_slice %1 {offsets = [0, 0], sizes = [128, 32], strides = [1, 1]} : vector<160x32xbf16> to vector<128x32xbf16>
    %3 = vector.extract_strided_slice %1 {offsets = [16, 0], sizes = [128, 32], strides = [1, 1]} : vector<160x32xbf16> to vector<128x32xbf16>
    %4 = vector.extract_strided_slice %1 {offsets = [32, 0], sizes = [128, 32], strides = [1, 1]} : vector<160x32xbf16> to vector<128x32xbf16>
    %5 = tpu.concatenate %2, %3, %4 in 1 : vector<128x32xbf16>, vector<128x32xbf16>, vector<128x32xbf16> -> vector<128x96xbf16>
    %c0_2 = arith.constant 0 : index
    %c0_3 = arith.constant 0 : index
    %6 = vector.load %arg2[%c0_2, %c0_3] : memref<96x64xbf16, #tpu.memory_space<vmem>>, vector<96x64xbf16>
    %cst = arith.constant dense<0.000000e+00> : vector<128x64xf32>
    %7 = tpu.matmul %5, %6, %cst {dimension_numbers = #tpu.dot_dimension_numbers<[1], [0], [0], [1], [0, 0, 1, 1], [], []>} : vector<128x96xbf16>, vector<96x64xbf16>, vector<128x64xf32> -> vector<128x64xf32>
    %c0_4 = arith.constant 0 : index
    %c0_5 = arith.constant 0 : index
    %8 = vector.load %arg3[%c0_4, %c0_5] : memref<1x64xf32, #tpu.memory_space<vmem>>, vector<1x64xf32>
    %9 = vector.broadcast %8 : vector<1x64xf32> to vector<128x64xf32>
    %10 = arith.addf %7, %9 : vector<128x64xf32>
    %cst_6 = arith.constant 0.000000e+00 : f32
    %11 = vector.broadcast %cst_6 : f32 to vector<128x64xf32>
    %12 = arith.maximumf %10, %11 : vector<128x64xf32>
    %13 = arith.truncf %12 : vector<128x64xf32> to vector<128x64xbf16>
    %c0_7 = arith.constant 0 : index
    %c0_8 = arith.constant 0 : index
    %14 = vector.load %arg4[%c0_7, %c0_8] : memref<64x128xbf16, #tpu.memory_space<vmem>>, vector<64x128xbf16>
    %cst_9 = arith.constant dense<0.000000e+00> : vector<128x128xf32>
    %15 = tpu.matmul %13, %14, %cst_9 {dimension_numbers = #tpu.dot_dimension_numbers<[1], [0], [0], [1], [0, 0, 1, 1], [], []>} : vector<128x64xbf16>, vector<64x128xbf16>, vector<128x128xf32> -> vector<128x128xf32>
    %16 = arith.truncf %15 : vector<128x128xf32> to vector<128x128xbf16>
    %c0_10 = arith.constant 0 : index
    %c0_11 = arith.constant 0 : index
    %17 = vector.load %arg12[%c0_10, %c0_11] : memref<128x128xbf16, #tpu.memory_space<vmem>>, vector<128x128xbf16>
    tpu.vector_store %arg12[%c0_10, %c0_11], %16 {strides = array<i32>} : memref<128x128xbf16, #tpu.memory_space<vmem>>, vector<128x128xbf16>,
    %c0_12 = arith.constant 0 : index
    %c0_13 = arith.constant 0 : index
    %18 = vector.load %arg5[%c0_12, %c0_13] : memref<32x128xbf16, #tpu.memory_space<vmem>>, vector<32x128xbf16>
    %c0_14 = arith.constant 0 : index
    %c0_15 = arith.constant 0 : index
    %19 = vector.load %arg6[%c0_14, %c0_15] : memref<1x128xf32, #tpu.memory_space<vmem>>, vector<1x128xf32>
    %20 = vector.shape_cast %19 : vector<1x128xf32> to vector<1x128xf32>
    %21 = vector.broadcast %20 : vector<1x128xf32> to vector<16x128xf32>
    %cst_16 = arith.constant 0.000000e+00 : bf16
    %22 = vector.broadcast %cst_16 : bf16 to vector<16x32xbf16>
    %cst_17 = arith.constant 0.000000e+00 : f32
    %23 = vector.broadcast %cst_17 : f32 to vector<16x32xf32>
    %c0_i32 = arith.constant 0 : i32
    %c16_i32 = arith.constant 16 : i32
    %24 = arith.muli %c0_i32, %c16_i32 : i32
    %25 = tpu.assume_multiple %24, 16 : i32
    %cst_18 = arith.constant dense<0.000000e+00> : vector<16x128xf32>
    %26 = tpu.matmul %22, %18, %cst_18 {dimension_numbers = #tpu.dot_dimension_numbers<[1], [0], [0], [1], [0, 0, 1, 1], [], []>} : vector<16x32xbf16>, vector<32x128xbf16>, vector<16x128xf32> -> vector<16x128xf32>
    %27 = arith.addf %26, %21 : vector<16x128xf32>
    %28 = arith.index_cast %25 : i32 to index
    %c0_19 = arith.constant 0 : index
    %29 = vector.load %arg12[%28, %c0_19] : memref<128x128xbf16, #tpu.memory_space<vmem>>, vector<16x128xbf16>
    %30 = arith.extf %29 : vector<16x128xbf16> to vector<16x128xf32>
    %31 = arith.addf %27, %30 : vector<16x128xf32>
    %32 = vector.extract_strided_slice %31 {offsets = [0, 0], sizes = [16, 96], strides = [1, 1]} : vector<16x128xf32> to vector<16x96xf32>
    %33 = arith.negf %32 : vector<16x96xf32>
    %34 = math.exp %33 : vector<16x96xf32>
    %cst_20 = arith.constant 1.000000e+00 : f32
    %35 = vector.broadcast %cst_20 : f32 to vector<16x96xf32>
    %36 = arith.addf %35, %34 : vector<16x96xf32>
    %37 = arith.divf %35, %36 : vector<16x96xf32>
    %38 = vector.extract_strided_slice %37 {offsets = [0, 0], sizes = [16, 32], strides = [1, 1]} : vector<16x96xf32> to vector<16x32xf32>
    %39 = vector.extract_strided_slice %37 {offsets = [0, 32], sizes = [16, 32], strides = [1, 1]} : vector<16x96xf32> to vector<16x32xf32>
    %40 = vector.extract_strided_slice %37 {offsets = [0, 64], sizes = [16, 32], strides = [1, 1]} : vector<16x96xf32> to vector<16x32xf32>
    %41 = vector.extract_strided_slice %31 {offsets = [0, 96], sizes = [16, 32], strides = [1, 1]} : vector<16x128xf32> to vector<16x32xf32>
    %42 = math.tanh %41 : vector<16x32xf32>
    %43 = arith.mulf %39, %23 : vector<16x32xf32>
    %44 = arith.mulf %38, %42 : vector<16x32xf32>
    %45 = arith.addf %43, %44 : vector<16x32xf32>
    %46 = math.tanh %45 : vector<16x32xf32>
    %47 = arith.mulf %40, %46 : vector<16x32xf32>
    %48 = arith.truncf %47 : vector<16x32xf32> to vector<16x32xbf16>
    %c1_i32 = arith.constant 1 : i32
    %c16_i32_21 = arith.constant 16 : i32
    %49 = arith.muli %c1_i32, %c16_i32_21 : i32
    %50 = tpu.assume_multiple %49, 16 : i32
    %cst_22 = arith.constant dense<0.000000e+00> : vector<16x128xf32>
    %51 = tpu.matmul %48, %18, %cst_22 {dimension_numbers = #tpu.dot_dimension_numbers<[1], [0], [0], [1], [0, 0, 1, 1], [], []>} : vector<16x32xbf16>, vector<32x128xbf16>, vector<16x128xf32> -> vector<16x128xf32>
    %52 = arith.addf %51, %21 : vector<16x128xf32>
    %53 = arith.index_cast %50 : i32 to index
    %c0_23 = arith.constant 0 : index
    %54 = vector.load %arg12[%53, %c0_23] : memref<128x128xbf16, #tpu.memory_space<vmem>>, vector<16x128xbf16>
    %55 = arith.extf %54 : vector<16x128xbf16> to vector<16x128xf32>
    %56 = arith.addf %52, %55 : vector<16x128xf32>
    %57 = vector.extract_strided_slice %56 {offsets = [0, 0], sizes = [16, 96], strides = [1, 1]} : vector<16x128xf32> to vector<16x96xf32>
    %58 = arith.negf %57 : vector<16x96xf32>
    %59 = math.exp %58 : vector<16x96xf32>
    %cst_24 = arith.constant 1.000000e+00 : f32
    %60 = vector.broadcast %cst_24 : f32 to vector<16x96xf32>
    %61 = arith.addf %60, %59 : vector<16x96xf32>
    %62 = arith.divf %60, %61 : vector<16x96xf32>
    %63 = vector.extract_strided_slice %62 {offsets = [0, 0], sizes = [16, 32], strides = [1, 1]} : vector<16x96xf32> to vector<16x32xf32>
    %64 = vector.extract_strided_slice %62 {offsets = [0, 32], sizes = [16, 32], strides = [1, 1]} : vector<16x96xf32> to vector<16x32xf32>
    %65 = vector.extract_strided_slice %62 {offsets = [0, 64], sizes = [16, 32], strides = [1, 1]} : vector<16x96xf32> to vector<16x32xf32>
    %66 = vector.extract_strided_slice %56 {offsets = [0, 96], sizes = [16, 32], strides = [1, 1]} : vector<16x128xf32> to vector<16x32xf32>
    %67 = math.tanh %66 : vector<16x32xf32>
    %68 = arith.mulf %64, %45 : vector<16x32xf32>
    %69 = arith.mulf %63, %67 : vector<16x32xf32>
    %70 = arith.addf %68, %69 : vector<16x32xf32>
    %71 = math.tanh %70 : vector<16x32xf32>
    %72 = arith.mulf %65, %71 : vector<16x32xf32>
    %73 = arith.truncf %72 : vector<16x32xf32> to vector<16x32xbf16>
    %c2_i32 = arith.constant 2 : i32
    %c16_i32_25 = arith.constant 16 : i32
    %74 = arith.muli %c2_i32, %c16_i32_25 : i32
    %75 = tpu.assume_multiple %74, 16 : i32
    %cst_26 = arith.constant dense<0.000000e+00> : vector<16x128xf32>
    %76 = tpu.matmul %73, %18, %cst_26 {dimension_numbers = #tpu.dot_dimension_numbers<[1], [0], [0], [1], [0, 0, 1, 1], [], []>} : vector<16x32xbf16>, vector<32x128xbf16>, vector<16x128xf32> -> vector<16x128xf32>
    %77 = arith.addf %76, %21 : vector<16x128xf32>
    %78 = arith.index_cast %75 : i32 to index
    %c0_27 = arith.constant 0 : index
    %79 = vector.load %arg12[%78, %c0_27] : memref<128x128xbf16, #tpu.memory_space<vmem>>, vector<16x128xbf16>
    %80 = arith.extf %79 : vector<16x128xbf16> to vector<16x128xf32>
    %81 = arith.addf %77, %80 : vector<16x128xf32>
    %82 = vector.extract_strided_slice %81 {offsets = [0, 0], sizes = [16, 96], strides = [1, 1]} : vector<16x128xf32> to vector<16x96xf32>
    %83 = arith.negf %82 : vector<16x96xf32>
    %84 = math.exp %83 : vector<16x96xf32>
    %cst_28 = arith.constant 1.000000e+00 : f32
    %85 = vector.broadcast %cst_28 : f32 to vector<16x96xf32>
    %86 = arith.addf %85, %84 : vector<16x96xf32>
    %87 = arith.divf %85, %86 : vector<16x96xf32>
    %88 = vector.extract_strided_slice %87 {offsets = [0, 0], sizes = [16, 32], strides = [1, 1]} : vector<16x96xf32> to vector<16x32xf32>
    %89 = vector.extract_strided_slice %87 {offsets = [0, 32], sizes = [16, 32], strides = [1, 1]} : vector<16x96xf32> to vector<16x32xf32>
    %90 = vector.extract_strided_slice %87 {offsets = [0, 64], sizes = [16, 32], strides = [1, 1]} : vector<16x96xf32> to vector<16x32xf32>
    %91 = vector.extract_strided_slice %81 {offsets = [0, 96], sizes = [16, 32], strides = [1, 1]} : vector<16x128xf32> to vector<16x32xf32>
    %92 = math.tanh %91 : vector<16x32xf32>
    %93 = arith.mulf %89, %70 : vector<16x32xf32>
    %94 = arith.mulf %88, %92 : vector<16x32xf32>
    %95 = arith.addf %93, %94 : vector<16x32xf32>
    %96 = math.tanh %95 : vector<16x32xf32>
    %97 = arith.mulf %90, %96 : vector<16x32xf32>
    %98 = arith.truncf %97 : vector<16x32xf32> to vector<16x32xbf16>
    %c3_i32 = arith.constant 3 : i32
    %c16_i32_29 = arith.constant 16 : i32
    %99 = arith.muli %c3_i32, %c16_i32_29 : i32
    %100 = tpu.assume_multiple %99, 16 : i32
    %cst_30 = arith.constant dense<0.000000e+00> : vector<16x128xf32>
    %101 = tpu.matmul %98, %18, %cst_30 {dimension_numbers = #tpu.dot_dimension_numbers<[1], [0], [0], [1], [0, 0, 1, 1], [], []>} : vector<16x32xbf16>, vector<32x128xbf16>, vector<16x128xf32> -> vector<16x128xf32>
    %102 = arith.addf %101, %21 : vector<16x128xf32>
    %103 = arith.index_cast %100 : i32 to index
    %c0_31 = arith.constant 0 : index
    %104 = vector.load %arg12[%103, %c0_31] : memref<128x128xbf16, #tpu.memory_space<vmem>>, vector<16x128xbf16>
    %105 = arith.extf %104 : vector<16x128xbf16> to vector<16x128xf32>
    %106 = arith.addf %102, %105 : vector<16x128xf32>
    %107 = vector.extract_strided_slice %106 {offsets = [0, 0], sizes = [16, 96], strides = [1, 1]} : vector<16x128xf32> to vector<16x96xf32>
    %108 = arith.negf %107 : vector<16x96xf32>
    %109 = math.exp %108 : vector<16x96xf32>
    %cst_32 = arith.constant 1.000000e+00 : f32
    %110 = vector.broadcast %cst_32 : f32 to vector<16x96xf32>
    %111 = arith.addf %110, %109 : vector<16x96xf32>
    %112 = arith.divf %110, %111 : vector<16x96xf32>
    %113 = vector.extract_strided_slice %112 {offsets = [0, 0], sizes = [16, 32], strides = [1, 1]} : vector<16x96xf32> to vector<16x32xf32>
    %114 = vector.extract_strided_slice %112 {offsets = [0, 32], sizes = [16, 32], strides = [1, 1]} : vector<16x96xf32> to vector<16x32xf32>
    %115 = vector.extract_strided_slice %112 {offsets = [0, 64], sizes = [16, 32], strides = [1, 1]} : vector<16x96xf32> to vector<16x32xf32>
    %116 = vector.extract_strided_slice %106 {offsets = [0, 96], sizes = [16, 32], strides = [1, 1]} : vector<16x128xf32> to vector<16x32xf32>
    %117 = math.tanh %116 : vector<16x32xf32>
    %118 = arith.mulf %114, %95 : vector<16x32xf32>
    %119 = arith.mulf %113, %117 : vector<16x32xf32>
    %120 = arith.addf %118, %119 : vector<16x32xf32>
    %121 = math.tanh %120 : vector<16x32xf32>
    %122 = arith.mulf %115, %121 : vector<16x32xf32>
    %123 = arith.truncf %122 : vector<16x32xf32> to vector<16x32xbf16>
    %c4_i32 = arith.constant 4 : i32
    %c16_i32_33 = arith.constant 16 : i32
    %124 = arith.muli %c4_i32, %c16_i32_33 : i32
    %125 = tpu.assume_multiple %124, 16 : i32
    %cst_34 = arith.constant dense<0.000000e+00> : vector<16x128xf32>
    %126 = tpu.matmul %123, %18, %cst_34 {dimension_numbers = #tpu.dot_dimension_numbers<[1], [0], [0], [1], [0, 0, 1, 1], [], []>} : vector<16x32xbf16>, vector<32x128xbf16>, vector<16x128xf32> -> vector<16x128xf32>
    %127 = arith.addf %126, %21 : vector<16x128xf32>
    %128 = arith.index_cast %125 : i32 to index
    %c0_35 = arith.constant 0 : index
    %129 = vector.load %arg12[%128, %c0_35] : memref<128x128xbf16, #tpu.memory_space<vmem>>, vector<16x128xbf16>
    %130 = arith.extf %129 : vector<16x128xbf16> to vector<16x128xf32>
    %131 = arith.addf %127, %130 : vector<16x128xf32>
    %132 = vector.extract_strided_slice %131 {offsets = [0, 0], sizes = [16, 96], strides = [1, 1]} : vector<16x128xf32> to vector<16x96xf32>
    %133 = arith.negf %132 : vector<16x96xf32>
    %134 = math.exp %133 : vector<16x96xf32>
    %cst_36 = arith.constant 1.000000e+00 : f32
    %135 = vector.broadcast %cst_36 : f32 to vector<16x96xf32>
    %136 = arith.addf %135, %134 : vector<16x96xf32>
    %137 = arith.divf %135, %136 : vector<16x96xf32>
    %138 = vector.extract_strided_slice %137 {offsets = [0, 0], sizes = [16, 32], strides = [1, 1]} : vector<16x96xf32> to vector<16x32xf32>
    %139 = vector.extract_strided_slice %137 {offsets = [0, 32], sizes = [16, 32], strides = [1, 1]} : vector<16x96xf32> to vector<16x32xf32>
    %140 = vector.extract_strided_slice %137 {offsets = [0, 64], sizes = [16, 32], strides = [1, 1]} : vector<16x96xf32> to vector<16x32xf32>
    %141 = vector.extract_strided_slice %131 {offsets = [0, 96], sizes = [16, 32], strides = [1, 1]} : vector<16x128xf32> to vector<16x32xf32>
    %142 = math.tanh %141 : vector<16x32xf32>
    %143 = arith.mulf %139, %120 : vector<16x32xf32>
    %144 = arith.mulf %138, %142 : vector<16x32xf32>
    %145 = arith.addf %143, %144 : vector<16x32xf32>
    %146 = math.tanh %145 : vector<16x32xf32>
    %147 = arith.mulf %140, %146 : vector<16x32xf32>
    %148 = arith.truncf %147 : vector<16x32xf32> to vector<16x32xbf16>
    %c5_i32 = arith.constant 5 : i32
    %c16_i32_37 = arith.constant 16 : i32
    %149 = arith.muli %c5_i32, %c16_i32_37 : i32
    %150 = tpu.assume_multiple %149, 16 : i32
    %cst_38 = arith.constant dense<0.000000e+00> : vector<16x128xf32>
    %151 = tpu.matmul %148, %18, %cst_38 {dimension_numbers = #tpu.dot_dimension_numbers<[1], [0], [0], [1], [0, 0, 1, 1], [], []>} : vector<16x32xbf16>, vector<32x128xbf16>, vector<16x128xf32> -> vector<16x128xf32>
    %152 = arith.addf %151, %21 : vector<16x128xf32>
    %153 = arith.index_cast %150 : i32 to index
    %c0_39 = arith.constant 0 : index
    %154 = vector.load %arg12[%153, %c0_39] : memref<128x128xbf16, #tpu.memory_space<vmem>>, vector<16x128xbf16>
    %155 = arith.extf %154 : vector<16x128xbf16> to vector<16x128xf32>
    %156 = arith.addf %152, %155 : vector<16x128xf32>
    %157 = vector.extract_strided_slice %156 {offsets = [0, 0], sizes = [16, 96], strides = [1, 1]} : vector<16x128xf32> to vector<16x96xf32>
    %158 = arith.negf %157 : vector<16x96xf32>
    %159 = math.exp %158 : vector<16x96xf32>
    %cst_40 = arith.constant 1.000000e+00 : f32
    %160 = vector.broadcast %cst_40 : f32 to vector<16x96xf32>
    %161 = arith.addf %160, %159 : vector<16x96xf32>
    %162 = arith.divf %160, %161 : vector<16x96xf32>
    %163 = vector.extract_strided_slice %162 {offsets = [0, 0], sizes = [16, 32], strides = [1, 1]} : vector<16x96xf32> to vector<16x32xf32>
    %164 = vector.extract_strided_slice %162 {offsets = [0, 32], sizes = [16, 32], strides = [1, 1]} : vector<16x96xf32> to vector<16x32xf32>
    %165 = vector.extract_strided_slice %162 {offsets = [0, 64], sizes = [16, 32], strides = [1, 1]} : vector<16x96xf32> to vector<16x32xf32>
    %166 = vector.extract_strided_slice %156 {offsets = [0, 96], sizes = [16, 32], strides = [1, 1]} : vector<16x128xf32> to vector<16x32xf32>
    %167 = math.tanh %166 : vector<16x32xf32>
    %168 = arith.mulf %164, %145 : vector<16x32xf32>
    %169 = arith.mulf %163, %167 : vector<16x32xf32>
    %170 = arith.addf %168, %169 : vector<16x32xf32>
    %171 = math.tanh %170 : vector<16x32xf32>
    %172 = arith.mulf %165, %171 : vector<16x32xf32>
    %173 = arith.truncf %172 : vector<16x32xf32> to vector<16x32xbf16>
    %c6_i32 = arith.constant 6 : i32
    %c16_i32_41 = arith.constant 16 : i32
    %174 = arith.muli %c6_i32, %c16_i32_41 : i32
    %175 = tpu.assume_multiple %174, 16 : i32
    %cst_42 = arith.constant dense<0.000000e+00> : vector<16x128xf32>
    %176 = tpu.matmul %173, %18, %cst_42 {dimension_numbers = #tpu.dot_dimension_numbers<[1], [0], [0], [1], [0, 0, 1, 1], [], []>} : vector<16x32xbf16>, vector<32x128xbf16>, vector<16x128xf32> -> vector<16x128xf32>
    %177 = arith.addf %176, %21 : vector<16x128xf32>
    %178 = arith.index_cast %175 : i32 to index
    %c0_43 = arith.constant 0 : index
    %179 = vector.load %arg12[%178, %c0_43] : memref<128x128xbf16, #tpu.memory_space<vmem>>, vector<16x128xbf16>
    %180 = arith.extf %179 : vector<16x128xbf16> to vector<16x128xf32>
    %181 = arith.addf %177, %180 : vector<16x128xf32>
    %182 = vector.extract_strided_slice %181 {offsets = [0, 0], sizes = [16, 96], strides = [1, 1]} : vector<16x128xf32> to vector<16x96xf32>
    %183 = arith.negf %182 : vector<16x96xf32>
    %184 = math.exp %183 : vector<16x96xf32>
    %cst_44 = arith.constant 1.000000e+00 : f32
    %185 = vector.broadcast %cst_44 : f32 to vector<16x96xf32>
    %186 = arith.addf %185, %184 : vector<16x96xf32>
    %187 = arith.divf %185, %186 : vector<16x96xf32>
    %188 = vector.extract_strided_slice %187 {offsets = [0, 0], sizes = [16, 32], strides = [1, 1]} : vector<16x96xf32> to vector<16x32xf32>
    %189 = vector.extract_strided_slice %187 {offsets = [0, 32], sizes = [16, 32], strides = [1, 1]} : vector<16x96xf32> to vector<16x32xf32>
    %190 = vector.extract_strided_slice %187 {offsets = [0, 64], sizes = [16, 32], strides = [1, 1]} : vector<16x96xf32> to vector<16x32xf32>
    %191 = vector.extract_strided_slice %181 {offsets = [0, 96], sizes = [16, 32], strides = [1, 1]} : vector<16x128xf32> to vector<16x32xf32>
    %192 = math.tanh %191 : vector<16x32xf32>
    %193 = arith.mulf %189, %170 : vector<16x32xf32>
    %194 = arith.mulf %188, %192 : vector<16x32xf32>
    %195 = arith.addf %193, %194 : vector<16x32xf32>
    %196 = math.tanh %195 : vector<16x32xf32>
    %197 = arith.mulf %190, %196 : vector<16x32xf32>
    %198 = arith.truncf %197 : vector<16x32xf32> to vector<16x32xbf16>
    %c7_i32 = arith.constant 7 : i32
    %c16_i32_45 = arith.constant 16 : i32
    %199 = arith.muli %c7_i32, %c16_i32_45 : i32
    %200 = tpu.assume_multiple %199, 16 : i32
    %cst_46 = arith.constant dense<0.000000e+00> : vector<16x128xf32>
    %201 = tpu.matmul %198, %18, %cst_46 {dimension_numbers = #tpu.dot_dimension_numbers<[1], [0], [0], [1], [0, 0, 1, 1], [], []>} : vector<16x32xbf16>, vector<32x128xbf16>, vector<16x128xf32> -> vector<16x128xf32>
    %202 = arith.addf %201, %21 : vector<16x128xf32>
    %203 = arith.index_cast %200 : i32 to index
    %c0_47 = arith.constant 0 : index
    %204 = vector.load %arg12[%203, %c0_47] : memref<128x128xbf16, #tpu.memory_space<vmem>>, vector<16x128xbf16>
    %205 = arith.extf %204 : vector<16x128xbf16> to vector<16x128xf32>
    %206 = arith.addf %202, %205 : vector<16x128xf32>
    %207 = vector.extract_strided_slice %206 {offsets = [0, 0], sizes = [16, 96], strides = [1, 1]} : vector<16x128xf32> to vector<16x96xf32>
    %208 = arith.negf %207 : vector<16x96xf32>
    %209 = math.exp %208 : vector<16x96xf32>
    %cst_48 = arith.constant 1.000000e+00 : f32
    %210 = vector.broadcast %cst_48 : f32 to vector<16x96xf32>
    %211 = arith.addf %210, %209 : vector<16x96xf32>
    %212 = arith.divf %210, %211 : vector<16x96xf32>
    %213 = vector.extract_strided_slice %212 {offsets = [0, 0], sizes = [16, 32], strides = [1, 1]} : vector<16x96xf32> to vector<16x32xf32>
    %214 = vector.extract_strided_slice %212 {offsets = [0, 32], sizes = [16, 32], strides = [1, 1]} : vector<16x96xf32> to vector<16x32xf32>
    %215 = vector.extract_strided_slice %212 {offsets = [0, 64], sizes = [16, 32], strides = [1, 1]} : vector<16x96xf32> to vector<16x32xf32>
    %216 = vector.extract_strided_slice %206 {offsets = [0, 96], sizes = [16, 32], strides = [1, 1]} : vector<16x128xf32> to vector<16x32xf32>
    %217 = math.tanh %216 : vector<16x32xf32>
    %218 = arith.mulf %214, %195 : vector<16x32xf32>
    %219 = arith.mulf %213, %217 : vector<16x32xf32>
    %220 = arith.addf %218, %219 : vector<16x32xf32>
    %221 = math.tanh %220 : vector<16x32xf32>
    %222 = arith.mulf %215, %221 : vector<16x32xf32>
    %223 = arith.truncf %222 : vector<16x32xf32> to vector<16x32xbf16>
    %c8_i32 = arith.constant 8 : i32
    %cst_49 = arith.constant 0.000000e+00 : bf16
    %224 = vector.broadcast %cst_49 : bf16 to vector<16x32xbf16>
    %225 = arith.maximumf %223, %224 : vector<16x32xbf16>
    %c0_50 = arith.constant 0 : index
    %c0_51 = arith.constant 0 : index
    %226 = vector.load %arg7[%c0_50, %c0_51] : memref<32x32xbf16, #tpu.memory_space<vmem>>, vector<32x32xbf16>
    %cst_52 = arith.constant dense<0.000000e+00> : vector<16x32xf32>
    %227 = tpu.matmul %225, %226, %cst_52 {dimension_numbers = #tpu.dot_dimension_numbers<[1], [0], [0], [1], [0, 0, 1, 1], [], []>} : vector<16x32xbf16>, vector<32x32xbf16>, vector<16x32xf32> -> vector<16x32xf32>
    %c0_53 = arith.constant 0 : index
    %c0_54 = arith.constant 0 : index
    %228 = vector.load %arg8[%c0_53, %c0_54] : memref<1x32xf32, #tpu.memory_space<vmem>>, vector<1x32xf32>
    %229 = vector.broadcast %228 : vector<1x32xf32> to vector<16x32xf32>
    %230 = arith.addf %227, %229 : vector<16x32xf32>
    %cst_55 = arith.constant 0.000000e+00 : f32
    %231 = vector.broadcast %cst_55 : f32 to vector<16x32xf32>
    %232 = arith.cmpf ogt, %230, %231 : vector<16x32xf32>
    %cst_56 = arith.constant 0.00999999977 : f32
    %233 = vector.broadcast %cst_56 : f32 to vector<16x32xf32>
    %234 = arith.mulf %233, %230 : vector<16x32xf32>
    %235 = arith.select %232, %230, %234 : vector<16x32xi1>, vector<16x32xf32>
    %236 = arith.truncf %235 : vector<16x32xf32> to vector<16x32xbf16>
    %c0_57 = arith.constant 0 : index
    %c0_58 = arith.constant 0 : index
    %237 = vector.load %arg9[%c0_57, %c0_58] : memref<32x128xbf16, #tpu.memory_space<vmem>>, vector<32x128xbf16>
    %cst_59 = arith.constant dense<0.000000e+00> : vector<16x128xf32>
    %238 = tpu.matmul %236, %237, %cst_59 {dimension_numbers = #tpu.dot_dimension_numbers<[1], [0], [0], [1], [0, 0, 1, 1], [], []>} : vector<16x32xbf16>, vector<32x128xbf16>, vector<16x128xf32> -> vector<16x128xf32>
    %c0_60 = arith.constant 0 : index
    %c0_61 = arith.constant 0 : index
    %239 = vector.load %arg10[%c0_60, %c0_61] : memref<1x128xf32, #tpu.memory_space<vmem>>, vector<1x128xf32>
    %240 = vector.broadcast %239 : vector<1x128xf32> to vector<16x128xf32>
    %241 = arith.addf %238, %240 : vector<16x128xf32>
    %cst_62 = arith.constant dense<0xFF800000> : vector<16xf32>
    %242 = vector.multi_reduction <maximumf>, %241, %cst_62 [1] : vector<16x128xf32> to vector<16xf32>
    %243 = vector.shape_cast %242 : vector<16xf32> to vector<16x1xf32>
    %244 = vector.broadcast %243 : vector<16x1xf32> to vector<16x128xf32>
    %245 = arith.subf %241, %244 : vector<16x128xf32>
    %246 = math.exp %245 : vector<16x128xf32>
    %cst_63 = arith.constant dense<0.000000e+00> : vector<16xf32>
    %247 = vector.multi_reduction <add>, %246, %cst_63 [1] : vector<16x128xf32> to vector<16xf32>
    %248 = vector.shape_cast %247 : vector<16xf32> to vector<16x1xf32>
    %249 = vector.broadcast %248 : vector<16x1xf32> to vector<16x128xf32>
    %250 = arith.divf %246, %249 : vector<16x128xf32>
    %c0_64 = arith.constant 0 : index
    %c0_65 = arith.constant 0 : index
    %251 = vector.load %arg11[%c0_64, %c0_65] : memref<16x128xf32, #tpu.memory_space<vmem>>, vector<16x128xf32>
    tpu.vector_store %arg11[%c0_64, %c0_65], %250 {strides = array<i32>} : memref<16x128xf32, #tpu.memory_space<vmem>>, vector<16x128xf32>,
    return
  }
  func.func @transform_0(%arg0: i32) -> (i32, i32, i32) {
    %c0_i32 = arith.constant 0 : i32
    %c0_i32_0 = arith.constant 0 : i32
    %c0_i32_1 = arith.constant 0 : i32
    return %arg0, %c0_i32, %c0_i32_0 : i32, i32, i32
  }
  func.func @transform_1(%arg0: i32) -> (i32, i32) {
    %c0_i32 = arith.constant 0 : i32
    %c0_i32_0 = arith.constant 0 : i32
    %c0_i32_1 = arith.constant 0 : i32
    return %c0_i32, %c0_i32_0 : i32, i32
  }
  func.func @transform_2(%arg0: i32) -> (i32, i32) {
    %c0_i32 = arith.constant 0 : i32
    %c0_i32_0 = arith.constant 0 : i32
    %c0_i32_1 = arith.constant 0 : i32
    return %c0_i32, %c0_i32_0 : i32, i32
  }
  func.func @transform_3(%arg0: i32) -> (i32, i32) {
    %c0_i32 = arith.constant 0 : i32
    %c0_i32_0 = arith.constant 0 : i32
    %c0_i32_1 = arith.constant 0 : i32
    return %c0_i32, %c0_i32_0 : i32, i32
  }
  func.func @transform_4(%arg0: i32) -> (i32, i32) {
    %c0_i32 = arith.constant 0 : i32
    %c0_i32_0 = arith.constant 0 : i32
    %c0_i32_1 = arith.constant 0 : i32
    return %c0_i32, %c0_i32_0 : i32, i32
  }
  func.func @transform_5(%arg0: i32) -> (i32, i32) {
    %c0_i32 = arith.constant 0 : i32
    %c0_i32_0 = arith.constant 0 : i32
    %c0_i32_1 = arith.constant 0 : i32
    return %c0_i32, %c0_i32_0 : i32, i32
  }
  func.func @transform_6(%arg0: i32) -> (i32, i32) {
    %c0_i32 = arith.constant 0 : i32
    %c0_i32_0 = arith.constant 0 : i32
    %c0_i32_1 = arith.constant 0 : i32
    return %c0_i32, %c0_i32_0 : i32, i32
  }
  func.func @transform_7(%arg0: i32) -> (i32, i32) {
    %c0_i32 = arith.constant 0 : i32
    %c0_i32_0 = arith.constant 0 : i32
    %c0_i32_1 = arith.constant 0 : i32
    return %c0_i32, %c0_i32_0 : i32, i32
  }
  func.func @transform_8(%arg0: i32) -> (i32, i32) {
    %c0_i32 = arith.constant 0 : i32
    %c0_i32_0 = arith.constant 0 : i32
    %c0_i32_1 = arith.constant 0 : i32
    return %c0_i32, %c0_i32_0 : i32, i32
  }
  func.func @transform_9(%arg0: i32) -> (i32, i32) {
    %c0_i32 = arith.constant 0 : i32
    %c0_i32_0 = arith.constant 0 : i32
    %c0_i32_1 = arith.constant 0 : i32
    return %c0_i32, %c0_i32_0 : i32, i32
  }
  func.func @transform_10(%arg0: i32) -> (i32, i32) {
    %c0_i32 = arith.constant 0 : i32
    %c0_i32_0 = arith.constant 0 : i32
    return %arg0, %c0_i32 : i32, i32
  }
}

</mosaic_0001>

<llo_original>
// kernel: tpu_custom_call.1
$region0: #{tpu_custom_call.1}
  #allocation0 [shape = 'u32[]', space=smem, size = 0x4, offset = 0x4, fixed_abs, tag = 'smem constant byte address 0x4 - core index']
  #allocation1 [shape = 'u32[72,128]{1,0:T(1,128)}', space=vmem, size = 0x9000, scoped, tag = 'internal scratch']
  #allocation2 [shape = 'bf16[128,128]{1,0:T(8,128)(2,1)}', space=vmem, size = 0x8000, scoped, tag = 'scratch operand']
  %s0 = inlined_call_operand.vmem [shape: bf16[1,160,32], index: 0, kind: input, shape index: {}]
  %s1 = inlined_call_operand.vmem [shape: bf16[96,64], index: 1, kind: input, shape index: {}]
  %s2 = inlined_call_operand.vmem [shape: f32[1,64], index: 2, kind: input, shape index: {}]
  %s3 = inlined_call_operand.vmem [shape: bf16[64,128], index: 3, kind: input, shape index: {}]
  %s4 = inlined_call_operand.vmem [shape: bf16[32,128], index: 4, kind: input, shape index: {}]
  %s5 = inlined_call_operand.vmem [shape: f32[1,128], index: 5, kind: input, shape index: {}]
  %s6 = inlined_call_operand.vmem [shape: bf16[32,32], index: 6, kind: input, shape index: {}]
  %s7 = inlined_call_operand.vmem [shape: f32[1,32], index: 7, kind: input, shape index: {}]
  %s8 = inlined_call_operand.vmem [shape: bf16[32,128], index: 8, kind: input, shape index: {}]
  %s9 = inlined_call_operand.vmem [shape: f32[1,128], index: 9, kind: input, shape index: {}]
  %s10 = inlined_call_operand.hbm [shape: f32[16,128], index: 10, kind: output, shape index: {}]
  %s11 = sld [smem:[#allocation0]]
  $region50: #{tpu_custom_call.1} parent=0
    _
  %s13 = ssub.s32 1, %s11
  %s14 = scalar_select 0, %s13, %s11
  $region1: #{tpu_custom_call.1} parent=0
    #allocation3 [shape = 'u8[8192]{0}', space=vmem, size = 0x2000, scoped, tag = 'output window, operand 0, single buffered']
    #allocation4 [shape = 's32[1]{0}', space=sflag, size = 0x4, scoped, tag = 'scoped memory for tpu_custom_call.1']
    %15 = vsyncpa [#allocation4], 0
    // Predicated region
    $region2: #{tpu_custom_call.1} parent=1 // pred_check
      _
    $region3: #{tpu_custom_call.1} parent=1 // pred_check_branch
      %17 = sbr.rel (0) target = $region5
    $region4: #{tpu_custom_call.1} parent=1 // pred_region
      _
    $region5: #{tpu_custom_call.1} parent=1 // pred_fallthru
      _
    // Predicated region
    $region6: #{tpu_custom_call.1} parent=1 // pred_check
      _
    $region7: #{tpu_custom_call.1} parent=1 // pred_check_branch
      %19 = sbr.rel (0) target = $region9
    $region8: #{tpu_custom_call.1} parent=1 // pred_region
      _
    $region9: #{tpu_custom_call.1} parent=1 // pred_fallthru
      _
    // Predicated region
    $region10: #{tpu_custom_call.1} parent=1 // pred_check
      _
    $region11: #{tpu_custom_call.1} parent=1 // pred_check_branch
      %21 = sbr.rel (0) target = $region13
    $region12: #{tpu_custom_call.1} parent=1 // pred_region
      _
    $region13: #{tpu_custom_call.1} parent=1 // pred_fallthru
      _
    // Predicated region
    $region14: #{tpu_custom_call.1} parent=1 // pred_check
      _
    $region15: #{tpu_custom_call.1} parent=1 // pred_check_branch
      %23 = sbr.rel (0) target = $region17
    $region16: #{tpu_custom_call.1} parent=1 // pred_region
      _
    $region17: #{tpu_custom_call.1} parent=1 // pred_fallthru
      _
    // Predicated region
    $region18: #{tpu_custom_call.1} parent=1 // pred_check
      _
    $region19: #{tpu_custom_call.1} parent=1 // pred_check_branch
      %25 = sbr.rel (0) target = $region21
    $region20: #{tpu_custom_call.1} parent=1 // pred_region
      _
    $region21: #{tpu_custom_call.1} parent=1 // pred_fallthru
      _
    // Predicated region
    $region22: #{tpu_custom_call.1} parent=1 // pred_check
      _
    $region23: #{tpu_custom_call.1} parent=1 // pred_check_branch
      %27 = sbr.rel (0) target = $region25
    $region24: #{tpu_custom_call.1} parent=1 // pred_region
      _
    $region25: #{tpu_custom_call.1} parent=1 // pred_fallthru
      _
    // Predicated region
    $region26: #{tpu_custom_call.1} parent=1 // pred_check
      _
    $region27: #{tpu_custom_call.1} parent=1 // pred_check_branch
      %29 = sbr.rel (0) target = $region29
    $region28: #{tpu_custom_call.1} parent=1 // pred_region
      _
    $region29: #{tpu_custom_call.1} parent=1 // pred_fallthru
      _
    // Predicated region
    $region30: #{tpu_custom_call.1} parent=1 // pred_check
      _
    $region31: #{tpu_custom_call.1} parent=1 // pred_check_branch
      %31 = sbr.rel (0) target = $region33
    $region32: #{tpu_custom_call.1} parent=1 // pred_region
      _
    $region33: #{tpu_custom_call.1} parent=1 // pred_fallthru
      _
    // Predicated region
    $region34: #{tpu_custom_call.1} parent=1 // pred_check
      _
    $region35: #{tpu_custom_call.1} parent=1 // pred_check_branch
      %33 = sbr.rel (0) target = $region37
    $region36: #{tpu_custom_call.1} parent=1 // pred_region
      _
    $region37: #{tpu_custom_call.1} parent=1 // pred_fallthru
      _
    // Predicated region
    $region38: #{tpu_custom_call.1} parent=1 // pred_check
      _
    $region39: #{tpu_custom_call.1} parent=1 // pred_check_branch
      %35 = sbr.rel (0) target = $region41
    $region40: #{tpu_custom_call.1} parent=1 // pred_region
      _
    $region41: #{tpu_custom_call.1} parent=1 // pred_fallthru
      _
    %v37 = vld [vmem:[%s0] sm:$0xf]
    %v38 = vld [vmem:[%s0 + $0x4] sm:$0xf]
    %v39 = vld [vmem:[%s0 + $0x8] sm:$0xf]
    %v40 = vld [vmem:[%s0 + $0xc] sm:$0xf]
    %v41 = vld [vmem:[%s0 + $0x10] sm:$0xf]
    %v42 = vld [vmem:[%s0 + $0x14] sm:$0xf]
    %v43 = vld [vmem:[%s0 + $0x18] sm:$0xf]
    %v44 = vld [vmem:[%s0 + $0x1c] sm:$0xf]
    %v45 = vld [vmem:[%s0 + $0x20] sm:$0xf]
    %v46 = vld [vmem:[%s0 + $0x24] sm:$0xf]
    %v47 = vld [vmem:[%s0 + $0x28] sm:$0xf]
    %v48 = vld [vmem:[%s0 + $0x2c] sm:$0xf]
    %v49 = vld [vmem:[%s0 + $0x30] sm:$0xf]
    %v50 = vld [vmem:[%s0 + $0x34] sm:$0xf]
    %v51 = vld [vmem:[%s0 + $0x38] sm:$0xf]
    %v52 = vld [vmem:[%s0 + $0x3c] sm:$0xf]
    %v53 = vld [vmem:[%s0 + $0x40] sm:$0xf]
    %v54 = vld [vmem:[%s0 + $0x44] sm:$0xf]
    %v55 = vld [vmem:[%s0 + $0x48] sm:$0xf]
    %v56 = vld [vmem:[%s0 + $0x4c] sm:$0xf]
    %v73 = vunpack.c.l.b16 %v37
    %v74 = vunpack.c.l.b16 %v38
    %v75 = vunpack.c.l.b16 %v39
    %v76 = vunpack.c.l.b16 %v40
    %v77 = vunpack.c.l.b16 %v41
    %v78 = vunpack.c.l.b16 %v42
    %v79 = vunpack.c.l.b16 %v43
    %v80 = vunpack.c.l.b16 %v44
    %v81 = vunpack.c.l.b16 %v45
    %v82 = vunpack.c.l.b16 %v46
    %v83 = vunpack.c.l.b16 %v47
    %v84 = vunpack.c.l.b16 %v48
    %v85 = vunpack.c.l.b16 %v49
    %v86 = vunpack.c.l.b16 %v50
    %v87 = vunpack.c.l.b16 %v51
    %v88 = vunpack.c.l.b16 %v52
    %v89 = vpack.c.b16 %v74, %v73
    %v90 = vpack.c.b16 %v76, %v75
    %v91 = vpack.c.b16 %v78, %v77
    %v92 = vpack.c.b16 %v80, %v79
    %v93 = vpack.c.b16 %v82, %v81
    %v94 = vpack.c.b16 %v84, %v83
    %v95 = vpack.c.b16 %v86, %v85
    %v96 = vpack.c.b16 %v88, %v87
    %v99 = vunpack.c.l.b16 %v53
    %v100 = vunpack.c.l.b16 %v54
    %v101 = vpack.c.b16 %v100, %v99
    %102 = vrot.lane.b32.xlu0 %v90, 32
    %v103 = vpop.permute.xlu0 %102
    %104 = vrot.lane.b32.xlu0 %v91, 32
    %v105 = vpop.permute.xlu0 %104
    %106 = vrot.lane.b32.xlu0 %v92, 32
    %v107 = vpop.permute.xlu0 %106
    %108 = vrot.lane.b32.xlu0 %v93, 32
    %v109 = vpop.permute.xlu0 %108
    %110 = vrot.lane.b32.xlu0 %v94, 32
    %v111 = vpop.permute.xlu0 %110
    %112 = vrot.lane.b32.xlu0 %v95, 32
    %v113 = vpop.permute.xlu0 %112
    %114 = vrot.lane.b32.xlu0 %v96, 32
    %v115 = vpop.permute.xlu0 %114
    %116 = vrot.lane.b32.xlu0 %v101, 32
    %v117 = vpop.permute.xlu0 %116
    %v120 = vunpack.c.l.b16 %v55
    %v121 = vunpack.c.l.b16 %v56
    %v122 = vpack.c.b16 %v121, %v120
    %123 = vrot.lane.b32.xlu0 %v91, 64
    %v124 = vpop.permute.xlu0 %123
    %125 = vrot.lane.b32.xlu0 %v92, 64
    %v126 = vpop.permute.xlu0 %125
    %127 = vrot.lane.b32.xlu0 %v93, 64
    %v128 = vpop.permute.xlu0 %127
    %129 = vrot.lane.b32.xlu0 %v94, 64
    %v130 = vpop.permute.xlu0 %129
    %131 = vrot.lane.b32.xlu0 %v95, 64
    %v132 = vpop.permute.xlu0 %131
    %133 = vrot.lane.b32.xlu0 %v96, 64
    %v134 = vpop.permute.xlu0 %133
    %135 = vrot.lane.b32.xlu0 %v101, 64
    %v136 = vpop.permute.xlu0 %135
    %137 = vrot.lane.b32.xlu0 %v122, 64
    %v138 = vpop.permute.xlu0 %137
    %vm139 = vcmask 261120
    %v142 = vsel %vm139, %v89, %v103
    %v145 = vsel %vm139, %v90, %v105
    %v148 = vsel %vm139, %v91, %v107
    %v151 = vsel %vm139, %v92, %v109
    %v154 = vsel %vm139, %v93, %v111
    %v157 = vsel %vm139, %v94, %v113
    %v160 = vsel %vm139, %v95, %v115
    %v163 = vsel %vm139, %v96, %v117
    %vm164 = vcmask 523264
    %v166 = vsel %vm164, %v142, %v124
    %v168 = vsel %vm164, %v145, %v126
    %v170 = vsel %vm164, %v148, %v128
    %v172 = vsel %vm164, %v151, %v130
    %v174 = vsel %vm164, %v154, %v132
    %v176 = vsel %vm164, %v157, %v134
    %v178 = vsel %vm164, %v160, %v136
    %v180 = vsel %vm164, %v163, %v138
    %v181 = vld [vmem:[%s1] sm:$0xf]
    %v182 = vld [vmem:[%s1 + $0x4] sm:$0xf]
    %v183 = vld [vmem:[%s1 + $0x8] sm:$0xf]
    %v184 = vld [vmem:[%s1 + $0xc] sm:$0xf]
    %v185 = vld [vmem:[%s1 + $0x10] sm:$0xf]
    %v186 = vld [vmem:[%s1 + $0x14] sm:$0xf]
    %v187 = vld [vmem:[%s1 + $0x18] sm:$0xf]
    %v188 = vld [vmem:[%s1 + $0x1c] sm:$0xf]
    %v189 = vld [vmem:[%s1 + $0x20] sm:$0xf]
    %v190 = vld [vmem:[%s1 + $0x24] sm:$0xf]
    %v191 = vld [vmem:[%s1 + $0x28] sm:$0xf]
    %v192 = vld [vmem:[%s1 + $0x2c] sm:$0xf]
    %v193 = vld [vmem:[%s2] sm:$0x1]
    %v195 = vperm.slane %v193, 0
    %v209 = vunpack.c.l.b16 %v181
    %v210 = vunpack.c.l.b16 %v182
    %v211 = vunpack.c.l.b16 %v183
    %v212 = vunpack.c.l.b16 %v184
    %v213 = vunpack.c.l.b16 %v185
    %v214 = vunpack.c.l.b16 %v186
    %v215 = vunpack.c.l.b16 %v187
    %v216 = vunpack.c.l.b16 %v188
    %v217 = vunpack.c.l.b16 %v189
    %v218 = vunpack.c.l.b16 %v190
    %v219 = vunpack.c.l.b16 %v191
    %v220 = vunpack.c.l.b16 %v192
    %v221 = vpack.c.b16 %v210, %v209
    %v222 = vpack.c.b16 %v212, %v211
    %v223 = vpack.c.b16 %v214, %v213
    %v224 = vpack.c.b16 %v216, %v215
    %v225 = vpack.c.b16 %v218, %v217
    %v226 = vpack.c.b16 %v220, %v219
    %vm233 = vcmask 785408
    %v234 = vsel %vm233, %v166, 0
    %v236 = vsel %vm233, %v168, 0
    %v238 = vsel %vm233, %v170, 0
    %v240 = vsel %vm233, %v172, 0
    %v242 = vsel %vm233, %v174, 0
    %v244 = vsel %vm233, %v176, 0
    %v246 = vsel %vm233, %v178, 0
    %v248 = vsel %vm233, %v180, 0
    %250 = vmatpush.bf16.msra.mxu0 0
    %251 = vmatpush.bf16.msra.mxu0 0
    %252 = vmatpush.bf16.msra.mxu0 %v226
    %253 = vmatpush.bf16.msra.mxu0 %v225
    %254 = vmatpush.bf16.msra.mxu0 %v224
    %255 = vmatpush.bf16.msra.mxu0 %v223
    %256 = vmatpush.bf16.msra.mxu0 %v222
    %257 = vmatpush.bf16.msra.mxu0 %v221
    %258 = vmatmul.bf16.gmra.mxu0 %v234
    %v259 = vpop.f32.mrf.mxu0
    %v260 = vadd.f32 %v195, %v259
    %v261 = vpop.f32.mrf.mxu0
    %v262 = vadd.f32 %v195, %v261
    %263 = vmatmul.bf16.gmra.mxu0 %v236
    %v264 = vpop.f32.mrf.mxu0
    %v265 = vadd.f32 %v195, %v264
    %v266 = vpop.f32.mrf.mxu0
    %v267 = vadd.f32 %v195, %v266
    %268 = vmatmul.bf16.gmra.mxu0 %v238
    %v269 = vpop.f32.mrf.mxu0
    %v270 = vadd.f32 %v195, %v269
    %v271 = vpop.f32.mrf.mxu0
    %v272 = vadd.f32 %v195, %v271
    %273 = vmatmul.bf16.gmra.mxu0 %v240
    %v274 = vpop.f32.mrf.mxu0
    %v275 = vadd.f32 %v195, %v274
    %v276 = vpop.f32.mrf.mxu0
    %v277 = vadd.f32 %v195, %v276
    %278 = vmatmul.bf16.gmra.mxu0 %v242
    %v279 = vpop.f32.mrf.mxu0
    %v280 = vadd.f32 %v195, %v279
    %v281 = vpop.f32.mrf.mxu0
    %v282 = vadd.f32 %v195, %v281
    %283 = vmatmul.bf16.gmra.mxu0 %v244
    %v284 = vpop.f32.mrf.mxu0
    %v285 = vadd.f32 %v195, %v284
    %v286 = vpop.f32.mrf.mxu0
    %v287 = vadd.f32 %v195, %v286
    %288 = vmatmul.bf16.gmra.mxu0 %v246
    %v289 = vpop.f32.mrf.mxu0
    %v290 = vadd.f32 %v195, %v289
    %v291 = vpop.f32.mrf.mxu0
    %v292 = vadd.f32 %v195, %v291
    %293 = vmatmul.bf16.gmra.mxu0 %v248
    %v294 = vpop.f32.mrf.mxu0
    %v295 = vadd.f32 %v195, %v294
    %v296 = vpop.f32.mrf.mxu0
    %v297 = vadd.f32 %v195, %v296
    %298 = vdwg.mxu0
    %v299 = vmax.f32 %v260, 0.0
    %v300 = vmax.f32 %v262, 0.0
    %v301 = vmax.f32 %v265, 0.0
    %v302 = vmax.f32 %v267, 0.0
    %v303 = vmax.f32 %v270, 0.0
    %v304 = vmax.f32 %v272, 0.0
    %v305 = vmax.f32 %v275, 0.0
    %v306 = vmax.f32 %v277, 0.0
    %v307 = vmax.f32 %v280, 0.0
    %v308 = vmax.f32 %v282, 0.0
    %v309 = vmax.f32 %v285, 0.0
    %v310 = vmax.f32 %v287, 0.0
    %v311 = vmax.f32 %v290, 0.0
    %v312 = vmax.f32 %v292, 0.0
    %v313 = vmax.f32 %v295, 0.0
    %v314 = vmax.f32 %v297, 0.0
    %v315 = vpack.c.bf16 %v300, %v299
    %v316 = vpack.c.bf16 %v302, %v301
    %v317 = vpack.c.bf16 %v304, %v303
    %v318 = vpack.c.bf16 %v306, %v305
    %v319 = vpack.c.bf16 %v308, %v307
    %v320 = vpack.c.bf16 %v310, %v309
    %v321 = vpack.c.bf16 %v312, %v311
    %v322 = vpack.c.bf16 %v314, %v313
    %v323 = vld [vmem:[%s3] sm:$0xf]
    %v324 = vld [vmem:[%s3 + $0x4] sm:$0xf]
    %v325 = vld [vmem:[%s3 + $0x8] sm:$0xf]
    %v326 = vld [vmem:[%s3 + $0xc] sm:$0xf]
    %v327 = vld [vmem:[%s3 + $0x10] sm:$0xf]
    %v328 = vld [vmem:[%s3 + $0x14] sm:$0xf]
    %v329 = vld [vmem:[%s3 + $0x18] sm:$0xf]
    %v330 = vld [vmem:[%s3 + $0x1c] sm:$0xf]
    %v339 = vunpack.c.l.b16 %v323
    %v340 = vunpack.c.l.b16 %v324
    %v341 = vunpack.c.l.b16 %v325
    %v342 = vunpack.c.l.b16 %v326
    %v343 = vunpack.c.l.b16 %v327
    %v344 = vunpack.c.l.b16 %v328
    %v345 = vunpack.c.l.b16 %v329
    %v346 = vunpack.c.l.b16 %v330
    %v347 = vpack.c.b16 %v340, %v339
    %v348 = vpack.c.b16 %v342, %v341
    %v349 = vpack.c.b16 %v344, %v343
    %v350 = vpack.c.b16 %v346, %v345
    %v356 = vsel %vm164, %v315, 0
    %v359 = vsel %vm164, %v316, 0
    %v362 = vsel %vm164, %v317, 0
    %v365 = vsel %vm164, %v318, 0
    %v368 = vsel %vm164, %v319, 0
    %v371 = vsel %vm164, %v320, 0
    %v374 = vsel %vm164, %v321, 0
    %v377 = vsel %vm164, %v322, 0
    %379 = vmatpush.bf16.msra.mxu0 0
    %380 = vmatpush.bf16.msra.mxu0 0
    %381 = vmatpush.bf16.msra.mxu0 0
    %382 = vmatpush.bf16.msra.mxu0 0
    %383 = vmatpush.bf16.msra.mxu0 %v350
    %384 = vmatpush.bf16.msra.mxu0 %v349
    %385 = vmatpush.bf16.msra.mxu0 %v348
    %386 = vmatpush.bf16.msra.mxu0 %v347
    %387 = vmatmul.bf16.gmra.mxu0 %v356
    %v388 = vpop.f32.mrf.mxu0
    %v389 = vadd.f32 0.0, %v388
    %v390 = vpop.f32.mrf.mxu0
    %v391 = vadd.f32 0.0, %v390
    %392 = vmatmul.bf16.gmra.mxu0 %v359
    %v393 = vpop.f32.mrf.mxu0
    %v394 = vadd.f32 0.0, %v393
    %v395 = vpop.f32.mrf.mxu0
    %v396 = vadd.f32 0.0, %v395
    %397 = vmatmul.bf16.gmra.mxu0 %v362
    %v398 = vpop.f32.mrf.mxu0
    %v399 = vadd.f32 0.0, %v398
    %v400 = vpop.f32.mrf.mxu0
    %v401 = vadd.f32 0.0, %v400
    %402 = vmatmul.bf16.gmra.mxu0 %v365
    %v403 = vpop.f32.mrf.mxu0
    %v404 = vadd.f32 0.0, %v403
    %v405 = vpop.f32.mrf.mxu0
    %v406 = vadd.f32 0.0, %v405
    %407 = vmatmul.bf16.gmra.mxu0 %v368
    %v408 = vpop.f32.mrf.mxu0
    %v409 = vadd.f32 0.0, %v408
    %v410 = vpop.f32.mrf.mxu0
    %v411 = vadd.f32 0.0, %v410
    %412 = vmatmul.bf16.gmra.mxu0 %v371
    %v413 = vpop.f32.mrf.mxu0
    %v414 = vadd.f32 0.0, %v413
    %v415 = vpop.f32.mrf.mxu0
    %v416 = vadd.f32 0.0, %v415
    %417 = vmatmul.bf16.gmra.mxu0 %v374
    %v418 = vpop.f32.mrf.mxu0
    %v419 = vadd.f32 0.0, %v418
    %v420 = vpop.f32.mrf.mxu0
    %v421 = vadd.f32 0.0, %v420
    %422 = vmatmul.bf16.gmra.mxu0 %v377
    %v423 = vpop.f32.mrf.mxu0
    %v424 = vadd.f32 0.0, %v423
    %v425 = vpop.f32.mrf.mxu0
    %v426 = vadd.f32 0.0, %v425
    %427 = vdwg.mxu0
    %v428 = vpack.c.bf16 %v389, %v389
    %v429 = vpack.c.bf16 %v391, %v391
    %v430 = vpack.c.bf16 %v394, %v394
    %v431 = vpack.c.bf16 %v396, %v396
    %v432 = vpack.c.bf16 %v399, %v399
    %v433 = vpack.c.bf16 %v401, %v401
    %v434 = vpack.c.bf16 %v404, %v404
    %v435 = vpack.c.bf16 %v406, %v406
    %v436 = vpack.c.bf16 %v409, %v409
    %v437 = vpack.c.bf16 %v411, %v411
    %v438 = vpack.c.bf16 %v414, %v414
    %v439 = vpack.c.bf16 %v416, %v416
    %v440 = vpack.c.bf16 %v419, %v419
    %v441 = vpack.c.bf16 %v421, %v421
    %v442 = vpack.c.bf16 %v424, %v424
    %v443 = vpack.c.bf16 %v426, %v426
    %444 = vst [vmem:[#allocation2] sm:$0xf] %v428
    %445 = vst [vmem:[#allocation2 + $0x4] sm:$0xf] %v429
    %446 = vst [vmem:[#allocation2 + $0x8] sm:$0xf] %v430
    %447 = vst [vmem:[#allocation2 + $0xc] sm:$0xf] %v431
    %448 = vst [vmem:[#allocation2 + $0x10] sm:$0xf] %v432
    %449 = vst [vmem:[#allocation2 + $0x14] sm:$0xf] %v433
    %450 = vst [vmem:[#allocation2 + $0x18] sm:$0xf] %v434
    %451 = vst [vmem:[#allocation2 + $0x1c] sm:$0xf] %v435
    %452 = vst [vmem:[#allocation2 + $0x20] sm:$0xf] %v436
    %453 = vst [vmem:[#allocation2 + $0x24] sm:$0xf] %v437
    %454 = vst [vmem:[#allocation2 + $0x28] sm:$0xf] %v438
    %455 = vst [vmem:[#allocation2 + $0x2c] sm:$0xf] %v439
    %456 = vst [vmem:[#allocation2 + $0x30] sm:$0xf] %v440
    %457 = vst [vmem:[#allocation2 + $0x34] sm:$0xf] %v441
    %458 = vst [vmem:[#allocation2 + $0x38] sm:$0xf] %v442
    %459 = vst [vmem:[#allocation2 + $0x3c] sm:$0xf] %v443
    %v460 = vld [vmem:[%s4] sm:$0xf]
    %v461 = vld [vmem:[%s4 + $0x4] sm:$0xf]
    %v462 = vld [vmem:[%s4 + $0x8] sm:$0xf]
    %v463 = vld [vmem:[%s4 + $0xc] sm:$0xf]
    %v464 = vld [vmem:[%s5] sm:$0x1]
    %v466 = vperm.slane %v464, 0
    %v472 = vunpack.c.l.b16 %v460
    %v473 = vunpack.c.l.b16 %v461
    %v474 = vunpack.c.l.b16 %v462
    %v475 = vunpack.c.l.b16 %v463
    %v476 = vpack.c.b16 %v473, %v472
    %v477 = vpack.c.b16 %v475, %v474
    %v481 = vsel %vm139, 0, 0
    %483 = vmatpush.bf16.msra.mxu0 0
    %484 = vmatpush.bf16.msra.mxu0 0
    %485 = vmatpush.bf16.msra.mxu0 0
    %486 = vmatpush.bf16.msra.mxu0 0
    %487 = vmatpush.bf16.msra.mxu0 0
    %488 = vmatpush.bf16.msra.mxu0 0
    %489 = vmatpush.bf16.msra.mxu0 %v477
    %490 = vmatpush.bf16.msra.mxu0 %v476
    %491 = vmatmul.bf16.gmra.mxu0 %v481
    %v492 = vpop.f32.mrf.mxu0
    %v493 = vadd.f32 %v466, %v492
    %v494 = vpop.f32.mrf.mxu0
    %v495 = vadd.f32 %v466, %v494
    %496 = vdwg.mxu0
    %v497 = vld [vmem:[#allocation2] sm:$0xf]
    %v498 = vld [vmem:[#allocation2 + $0x4] sm:$0xf]
    %v499 = vunpack.c.l.bf16 %v497
    %v500 = vunpack.c.l.bf16 %v498
    %v501 = vadd.f32 %v493, %v499
    %v502 = vadd.f32 %v495, %v500
    %v503 = vxor.u32 %v501, 2147483648
    %v504 = vxor.u32 %v502, 2147483648
    %v505 = vmul.f32 %v503, 1.442695
    %v506 = vpow.pop %v505
    %v507 = vmul.f32 %v504, 1.442695
    %v508 = vpow.pop %v507
    %v509 = vadd.f32 %v506, 1.0
    %v510 = vadd.f32 %v508, 1.0
    %v511 = vrcp.pop %v509
    %v512 = vmul.f32 %v509, %v511
    %v513 = vsub.f32 1.0, %v512
    %v514 = vmul.f32 %v511, %v513
    %v515 = vadd.f32 %v511, %v514
    %vm516 = vweird.f32 %v509
    %vm517 = vweird.f32 %v511
    %vm518 = vmor %vm516, %vm517
    %v519 = vsel %vm518, %v511, %v515
    %v520 = vand.u32 2147483647, %v509
    %vm521 = vcmp.eq.f32.partialorder %v520, 8.507059e+37
    %v522 = vand.u32 %v509, 2147483648
    %v523 = vor.u32 1.1754944e-38, %v522
    %v524 = vsel %vm521, %v523, %v519
    %v525 = vmul.f32 1.0, %v524
    %v526 = vrcp.pop %v510
    %v527 = vmul.f32 %v510, %v526
    %v528 = vsub.f32 1.0, %v527
    %v529 = vmul.f32 %v526, %v528
    %v530 = vadd.f32 %v526, %v529
    %vm531 = vweird.f32 %v510
    %vm532 = vweird.f32 %v526
    %vm533 = vmor %vm531, %vm532
    %v534 = vsel %vm533, %v526, %v530
    %v535 = vand.u32 2147483647, %v510
    %vm536 = vcmp.eq.f32.partialorder %v535, 8.507059e+37
    %v537 = vand.u32 %v510, 2147483648
    %v538 = vor.u32 1.1754944e-38, %v537
    %v539 = vsel %vm536, %v538, %v534
    %v540 = vmul.f32 1.0, %v539
    %v541 = vtanh.pop %v501
    %v542 = vtanh.pop %v502
    %v543 = vmul.f32 %v525, 0.0
    %v544 = vmul.f32 %v540, 0.0
    %547 = vrot.lane.b32.xlu0 %v541, 32
    %v548 = vpop.permute.xlu0 %547
    %549 = vrot.lane.b32.xlu0 %v542, 32
    %v550 = vpop.permute.xlu0 %549
    %v553 = vmul.f32 %v525, %v548
    %v554 = vmul.f32 %v540, %v550
    %557 = vrot.lane.b32.xlu0 %v553, 32
    %v558 = vpop.permute.xlu0 %557
    %559 = vrot.lane.b32.xlu0 %v554, 32
    %v560 = vpop.permute.xlu0 %559
    %v563 = vadd.f32 %v543, %v558
    %v564 = vadd.f32 %v544, %v560
    %v565 = vtanh.pop %v563
    %v566 = vtanh.pop %v564
    %569 = vrot.lane.b32.xlu0 %v565, 32
    %v570 = vpop.permute.xlu0 %569
    %571 = vrot.lane.b32.xlu0 %v566, 32
    %v572 = vpop.permute.xlu0 %571
    %v575 = vmul.f32 %v525, %v570
    %v576 = vmul.f32 %v540, %v572
    %v577 = vpack.c.bf16 %v576, %v575
    %579 = vrot.lane.b32.xlu0 %v577, 64
    %v580 = vpop.permute.xlu0 %579
    %v582 = vsel %vm139, %v580, 0
    %584 = vmatpush.bf16.msra.mxu0 0
    %585 = vmatpush.bf16.msra.mxu0 0
    %586 = vmatpush.bf16.msra.mxu0 0
    %587 = vmatpush.bf16.msra.mxu0 0
    %588 = vmatpush.bf16.msra.mxu0 0
    %589 = vmatpush.bf16.msra.mxu0 0
    %590 = vmatpush.bf16.msra.mxu0 %v477
    %591 = vmatpush.bf16.msra.mxu0 %v476
    %592 = vmatmul.bf16.gmra.mxu0 %v582
    %v593 = vpop.f32.mrf.mxu0
    %v594 = vadd.f32 %v466, %v593
    %v595 = vpop.f32.mrf.mxu0
    %v596 = vadd.f32 %v466, %v595
    %597 = vdwg.mxu0
    %s598 = scalar_lea.vmem [#allocation2], 8
    %v599 = vld [vmem:[%s598] sm:$0xf]
    %v600 = vld [vmem:[%s598 + $0x4] sm:$0xf]
    %v601 = vunpack.c.l.bf16 %v599
    %v602 = vunpack.c.l.bf16 %v600
    %v603 = vadd.f32 %v594, %v601
    %v604 = vadd.f32 %v596, %v602
    %v605 = vxor.u32 %v603, 2147483648
    %v606 = vxor.u32 %v604, 2147483648
    %v607 = vmul.f32 %v605, 1.442695
    %v608 = vpow.pop %v607
    %v609 = vmul.f32 %v606, 1.442695
    %v610 = vpow.pop %v609
    %v611 = vadd.f32 %v608, 1.0
    %v612 = vadd.f32 %v610, 1.0
    %v613 = vrcp.pop %v611
    %v614 = vmul.f32 %v611, %v613
    %v615 = vsub.f32 1.0, %v614
    %v616 = vmul.f32 %v613, %v615
    %v617 = vadd.f32 %v613, %v616
    %vm618 = vweird.f32 %v611
    %vm619 = vweird.f32 %v613
    %vm620 = vmor %vm618, %vm619
    %v621 = vsel %vm620, %v613, %v617
    %v622 = vand.u32 2147483647, %v611
    %vm623 = vcmp.eq.f32.partialorder %v622, 8.507059e+37
    %v624 = vand.u32 %v611, 2147483648
    %v625 = vor.u32 1.1754944e-38, %v624
    %v626 = vsel %vm623, %v625, %v621
    %v627 = vmul.f32 1.0, %v626
    %v628 = vrcp.pop %v612
    %v629 = vmul.f32 %v612, %v628
    %v630 = vsub.f32 1.0, %v629
    %v631 = vmul.f32 %v628, %v630
    %v632 = vadd.f32 %v628, %v631
    %vm633 = vweird.f32 %v612
    %vm634 = vweird.f32 %v628
    %vm635 = vmor %vm633, %vm634
    %v636 = vsel %vm635, %v628, %v632
    %v637 = vand.u32 2147483647, %v612
    %vm638 = vcmp.eq.f32.partialorder %v637, 8.507059e+37
    %v639 = vand.u32 %v612, 2147483648
    %v640 = vor.u32 1.1754944e-38, %v639
    %v641 = vsel %vm638, %v640, %v636
    %v642 = vmul.f32 1.0, %v641
    %v643 = vtanh.pop %v603
    %v644 = vtanh.pop %v604
    %v645 = vmul.f32 %v627, %v563
    %v646 = vmul.f32 %v642, %v564
    %649 = vrot.lane.b32.xlu0 %v643, 32
    %v650 = vpop.permute.xlu0 %649
    %651 = vrot.lane.b32.xlu0 %v644, 32
    %v652 = vpop.permute.xlu0 %651
    %v655 = vmul.f32 %v627, %v650
    %v656 = vmul.f32 %v642, %v652
    %659 = vrot.lane.b32.xlu0 %v655, 32
    %v660 = vpop.permute.xlu0 %659
    %661 = vrot.lane.b32.xlu0 %v656, 32
    %v662 = vpop.permute.xlu0 %661
    %v665 = vadd.f32 %v645, %v660
    %v666 = vadd.f32 %v646, %v662
    %v667 = vtanh.pop %v665
    %v668 = vtanh.pop %v666
    %671 = vrot.lane.b32.xlu0 %v667, 32
    %v672 = vpop.permute.xlu0 %671
    %673 = vrot.lane.b32.xlu0 %v668, 32
    %v674 = vpop.permute.xlu0 %673
    %v677 = vmul.f32 %v627, %v672
    %v678 = vmul.f32 %v642, %v674
    %v679 = vpack.c.bf16 %v678, %v677
    %681 = vrot.lane.b32.xlu0 %v679, 64
    %v682 = vpop.permute.xlu0 %681
    %v684 = vsel %vm139, %v682, 0
    %686 = vmatpush.bf16.msra.mxu0 0
    %687 = vmatpush.bf16.msra.mxu0 0
    %688 = vmatpush.bf16.msra.mxu0 0
    %689 = vmatpush.bf16.msra.mxu0 0
    %690 = vmatpush.bf16.msra.mxu0 0
    %691 = vmatpush.bf16.msra.mxu0 0
    %692 = vmatpush.bf16.msra.mxu0 %v477
    %693 = vmatpush.bf16.msra.mxu0 %v476
    %694 = vmatmul.bf16.gmra.mxu0 %v684
    %v695 = vpop.f32.mrf.mxu0
    %v696 = vadd.f32 %v466, %v695
    %v697 = vpop.f32.mrf.mxu0
    %v698 = vadd.f32 %v466, %v697
    %699 = vdwg.mxu0
    %s700 = scalar_lea.vmem [#allocation2], 16
    %v701 = vld [vmem:[%s700] sm:$0xf]
    %v702 = vld [vmem:[%s700 + $0x4] sm:$0xf]
    %v703 = vunpack.c.l.bf16 %v701
    %v704 = vunpack.c.l.bf16 %v702
    %v705 = vadd.f32 %v696, %v703
    %v706 = vadd.f32 %v698, %v704
    %v707 = vxor.u32 %v705, 2147483648
    %v708 = vxor.u32 %v706, 2147483648
    %v709 = vmul.f32 %v707, 1.442695
    %v710 = vpow.pop %v709
    %v711 = vmul.f32 %v708, 1.442695
    %v712 = vpow.pop %v711
    %v713 = vadd.f32 %v710, 1.0
    %v714 = vadd.f32 %v712, 1.0
    %v715 = vrcp.pop %v713
    %v716 = vmul.f32 %v713, %v715
    %v717 = vsub.f32 1.0, %v716
    %v718 = vmul.f32 %v715, %v717
    %v719 = vadd.f32 %v715, %v718
    %vm720 = vweird.f32 %v713
    %vm721 = vweird.f32 %v715
    %vm722 = vmor %vm720, %vm721
    %v723 = vsel %vm722, %v715, %v719
    %v724 = vand.u32 2147483647, %v713
    %vm725 = vcmp.eq.f32.partialorder %v724, 8.507059e+37
    %v726 = vand.u32 %v713, 2147483648
    %v727 = vor.u32 1.1754944e-38, %v726
    %v728 = vsel %vm725, %v727, %v723
    %v729 = vmul.f32 1.0, %v728
    %v730 = vrcp.pop %v714
    %v731 = vmul.f32 %v714, %v730
    %v732 = vsub.f32 1.0, %v731
    %v733 = vmul.f32 %v730, %v732
    %v734 = vadd.f32 %v730, %v733
    %vm735 = vweird.f32 %v714
    %vm736 = vweird.f32 %v730
    %vm737 = vmor %vm735, %vm736
    %v738 = vsel %vm737, %v730, %v734
    %v739 = vand.u32 2147483647, %v714
    %vm740 = vcmp.eq.f32.partialorder %v739, 8.507059e+37
    %v741 = vand.u32 %v714, 2147483648
    %v742 = vor.u32 1.1754944e-38, %v741
    %v743 = vsel %vm740, %v742, %v738
    %v744 = vmul.f32 1.0, %v743
    %v745 = vtanh.pop %v705
    %v746 = vtanh.pop %v706
    %v747 = vmul.f32 %v729, %v665
    %v748 = vmul.f32 %v744, %v666
    %751 = vrot.lane.b32.xlu0 %v745, 32
    %v752 = vpop.permute.xlu0 %751
    %753 = vrot.lane.b32.xlu0 %v746, 32
    %v754 = vpop.permute.xlu0 %753
    %v757 = vmul.f32 %v729, %v752
    %v758 = vmul.f32 %v744, %v754
    %761 = vrot.lane.b32.xlu0 %v757, 32
    %v762 = vpop.permute.xlu0 %761
    %763 = vrot.lane.b32.xlu0 %v758, 32
    %v764 = vpop.permute.xlu0 %763
    %v767 = vadd.f32 %v747, %v762
    %v768 = vadd.f32 %v748, %v764
    %v769 = vtanh.pop %v767
    %v770 = vtanh.pop %v768
    %773 = vrot.lane.b32.xlu0 %v769, 32
    %v774 = vpop.permute.xlu0 %773
    %775 = vrot.lane.b32.xlu0 %v770, 32
    %v776 = vpop.permute.xlu0 %775
    %v779 = vmul.f32 %v729, %v774
    %v780 = vmul.f32 %v744, %v776
    %v781 = vpack.c.bf16 %v780, %v779
    %783 = vrot.lane.b32.xlu0 %v781, 64
    %v784 = vpop.permute.xlu0 %783
    %v786 = vsel %vm139, %v784, 0
    %788 = vmatpush.bf16.msra.mxu0 0
    %789 = vmatpush.bf16.msra.mxu0 0
    %790 = vmatpush.bf16.msra.mxu0 0
    %791 = vmatpush.bf16.msra.mxu0 0
    %792 = vmatpush.bf16.msra.mxu0 0
    %793 = vmatpush.bf16.msra.mxu0 0
    %794 = vmatpush.bf16.msra.mxu0 %v477
    %795 = vmatpush.bf16.msra.mxu0 %v476
    %796 = vmatmul.bf16.gmra.mxu0 %v786
    %v797 = vpop.f32.mrf.mxu0
    %v798 = vadd.f32 %v466, %v797
    %v799 = vpop.f32.mrf.mxu0
    %v800 = vadd.f32 %v466, %v799
    %801 = vdwg.mxu0
    %s802 = scalar_lea.vmem [#allocation2], 24
    %v803 = vld [vmem:[%s802] sm:$0xf]
    %v804 = vld [vmem:[%s802 + $0x4] sm:$0xf]
    %v805 = vunpack.c.l.bf16 %v803
    %v806 = vunpack.c.l.bf16 %v804
    %v807 = vadd.f32 %v798, %v805
    %v808 = vadd.f32 %v800, %v806
    %v809 = vxor.u32 %v807, 2147483648
    %v810 = vxor.u32 %v808, 2147483648
    %v811 = vmul.f32 %v809, 1.442695
    %v812 = vpow.pop %v811
    %v813 = vmul.f32 %v810, 1.442695
    %v814 = vpow.pop %v813
    %v815 = vadd.f32 %v812, 1.0
    %v816 = vadd.f32 %v814, 1.0
    %v817 = vrcp.pop %v815
    %v818 = vmul.f32 %v815, %v817
    %v819 = vsub.f32 1.0, %v818
    %v820 = vmul.f32 %v817, %v819
    %v821 = vadd.f32 %v817, %v820
    %vm822 = vweird.f32 %v815
    %vm823 = vweird.f32 %v817
    %vm824 = vmor %vm822, %vm823
    %v825 = vsel %vm824, %v817, %v821
    %v826 = vand.u32 2147483647, %v815
    %vm827 = vcmp.eq.f32.partialorder %v826, 8.507059e+37
    %v828 = vand.u32 %v815, 2147483648
    %v829 = vor.u32 1.1754944e-38, %v828
    %v830 = vsel %vm827, %v829, %v825
    %v831 = vmul.f32 1.0, %v830
    %v832 = vrcp.pop %v816
    %v833 = vmul.f32 %v816, %v832
    %v834 = vsub.f32 1.0, %v833
    %v835 = vmul.f32 %v832, %v834
    %v836 = vadd.f32 %v832, %v835
    %vm837 = vweird.f32 %v816
    %vm838 = vweird.f32 %v832
    %vm839 = vmor %vm837, %vm838
    %v840 = vsel %vm839, %v832, %v836
    %v841 = vand.u32 2147483647, %v816
    %vm842 = vcmp.eq.f32.partialorder %v841, 8.507059e+37
    %v843 = vand.u32 %v816, 2147483648
    %v844 = vor.u32 1.1754944e-38, %v843
    %v845 = vsel %vm842, %v844, %v840
    %v846 = vmul.f32 1.0, %v845
    %v847 = vtanh.pop %v807
    %v848 = vtanh.pop %v808
    %v849 = vmul.f32 %v831, %v767
    %v850 = vmul.f32 %v846, %v768
    %853 = vrot.lane.b32.xlu0 %v847, 32
    %v854 = vpop.permute.xlu0 %853
    %855 = vrot.lane.b32.xlu0 %v848, 32
    %v856 = vpop.permute.xlu0 %855
    %v859 = vmul.f32 %v831, %v854
    %v860 = vmul.f32 %v846, %v856
    %863 = vrot.lane.b32.xlu0 %v859, 32
    %v864 = vpop.permute.xlu0 %863
    %865 = vrot.lane.b32.xlu0 %v860, 32
    %v866 = vpop.permute.xlu0 %865
    %v869 = vadd.f32 %v849, %v864
    %v870 = vadd.f32 %v850, %v866
    %v871 = vtanh.pop %v869
    %v872 = vtanh.pop %v870
    %875 = vrot.lane.b32.xlu0 %v871, 32
    %v876 = vpop.permute.xlu0 %875
    %877 = vrot.lane.b32.xlu0 %v872, 32
    %v878 = vpop.permute.xlu0 %877
    %v881 = vmul.f32 %v831, %v876
    %v882 = vmul.f32 %v846, %v878
    %v883 = vpack.c.bf16 %v882, %v881
    %885 = vrot.lane.b32.xlu0 %v883, 64
    %v886 = vpop.permute.xlu0 %885
    %v888 = vsel %vm139, %v886, 0
    %890 = vmatpush.bf16.msra.mxu0 0
    %891 = vmatpush.bf16.msra.mxu0 0
    %892 = vmatpush.bf16.msra.mxu0 0
    %893 = vmatpush.bf16.msra.mxu0 0
    %894 = vmatpush.bf16.msra.mxu0 0
    %895 = vmatpush.bf16.msra.mxu0 0
    %896 = vmatpush.bf16.msra.mxu0 %v477
    %897 = vmatpush.bf16.msra.mxu0 %v476
    %898 = vmatmul.bf16.gmra.mxu0 %v888
    %v899 = vpop.f32.mrf.mxu0
    %v900 = vadd.f32 %v466, %v899
    %v901 = vpop.f32.mrf.mxu0
    %v902 = vadd.f32 %v466, %v901
    %903 = vdwg.mxu0
    %s904 = scalar_lea.vmem [#allocation2], 32
    %v905 = vld [vmem:[%s904] sm:$0xf]
    %v906 = vld [vmem:[%s904 + $0x4] sm:$0xf]
    %v907 = vunpack.c.l.bf16 %v905
    %v908 = vunpack.c.l.bf16 %v906
    %v909 = vadd.f32 %v900, %v907
    %v910 = vadd.f32 %v902, %v908
    %v911 = vxor.u32 %v909, 2147483648
    %v912 = vxor.u32 %v910, 2147483648
    %v913 = vmul.f32 %v911, 1.442695
    %v914 = vpow.pop %v913
    %v915 = vmul.f32 %v912, 1.442695
    %v916 = vpow.pop %v915
    %v917 = vadd.f32 %v914, 1.0
    %v918 = vadd.f32 %v916, 1.0
    %v919 = vrcp.pop %v917
    %v920 = vmul.f32 %v917, %v919
    %v921 = vsub.f32 1.0, %v920
    %v922 = vmul.f32 %v919, %v921
    %v923 = vadd.f32 %v919, %v922
    %vm924 = vweird.f32 %v917
    %vm925 = vweird.f32 %v919
    %vm926 = vmor %vm924, %vm925
    %v927 = vsel %vm926, %v919, %v923
    %v928 = vand.u32 2147483647, %v917
    %vm929 = vcmp.eq.f32.partialorder %v928, 8.507059e+37
    %v930 = vand.u32 %v917, 2147483648
    %v931 = vor.u32 1.1754944e-38, %v930
    %v932 = vsel %vm929, %v931, %v927
    %v933 = vmul.f32 1.0, %v932
    %v934 = vrcp.pop %v918
    %v935 = vmul.f32 %v918, %v934
    %v936 = vsub.f32 1.0, %v935
    %v937 = vmul.f32 %v934, %v936
    %v938 = vadd.f32 %v934, %v937
    %vm939 = vweird.f32 %v918
    %vm940 = vweird.f32 %v934
    %vm941 = vmor %vm939, %vm940
    %v942 = vsel %vm941, %v934, %v938
    %v943 = vand.u32 2147483647, %v918
    %vm944 = vcmp.eq.f32.partialorder %v943, 8.507059e+37
    %v945 = vand.u32 %v918, 2147483648
    %v946 = vor.u32 1.1754944e-38, %v945
    %v947 = vsel %vm944, %v946, %v942
    %v948 = vmul.f32 1.0, %v947
    %v949 = vtanh.pop %v909
    %v950 = vtanh.pop %v910
    %v951 = vmul.f32 %v933, %v869
    %v952 = vmul.f32 %v948, %v870
    %955 = vrot.lane.b32.xlu0 %v949, 32
    %v956 = vpop.permute.xlu0 %955
    %957 = vrot.lane.b32.xlu0 %v950, 32
    %v958 = vpop.permute.xlu0 %957
    %v961 = vmul.f32 %v933, %v956
    %v962 = vmul.f32 %v948, %v958
    %965 = vrot.lane.b32.xlu0 %v961, 32
    %v966 = vpop.permute.xlu0 %965
    %967 = vrot.lane.b32.xlu0 %v962, 32
    %v968 = vpop.permute.xlu0 %967
    %v971 = vadd.f32 %v951, %v966
    %v972 = vadd.f32 %v952, %v968
    %v973 = vtanh.pop %v971
    %v974 = vtanh.pop %v972
    %977 = vrot.lane.b32.xlu0 %v973, 32
    %v978 = vpop.permute.xlu0 %977
    %979 = vrot.lane.b32.xlu0 %v974, 32
    %v980 = vpop.permute.xlu0 %979
    %v983 = vmul.f32 %v933, %v978
    %v984 = vmul.f32 %v948, %v980
    %v985 = vpack.c.bf16 %v984, %v983
    %987 = vrot.lane.b32.xlu0 %v985, 64
    %v988 = vpop.permute.xlu0 %987
    %v990 = vsel %vm139, %v988, 0
    %992 = vmatpush.bf16.msra.mxu0 0
    %993 = vmatpush.bf16.msra.mxu0 0
    %994 = vmatpush.bf16.msra.mxu0 0
    %995 = vmatpush.bf16.msra.mxu0 0
    %996 = vmatpush.bf16.msra.mxu0 0
    %997 = vmatpush.bf16.msra.mxu0 0
    %998 = vmatpush.bf16.msra.mxu0 %v477
    %999 = vmatpush.bf16.msra.mxu0 %v476
    %1000 = vmatmul.bf16.gmra.mxu0 %v990
    %v1001 = vpop.f32.mrf.mxu0
    %v1002 = vadd.f32 %v466, %v1001
    %v1003 = vpop.f32.mrf.mxu0
    %v1004 = vadd.f32 %v466, %v1003
    %1005 = vdwg.mxu0
    %s1006 = scalar_lea.vmem [#allocation2], 40
    %v1007 = vld [vmem:[%s1006] sm:$0xf]
    %v1008 = vld [vmem:[%s1006 + $0x4] sm:$0xf]
    %v1009 = vunpack.c.l.bf16 %v1007
    %v1010 = vunpack.c.l.bf16 %v1008
    %v1011 = vadd.f32 %v1002, %v1009
    %v1012 = vadd.f32 %v1004, %v1010
    %v1013 = vxor.u32 %v1011, 2147483648
    %v1014 = vxor.u32 %v1012, 2147483648
    %v1015 = vmul.f32 %v1013, 1.442695
    %v1016 = vpow.pop %v1015
    %v1017 = vmul.f32 %v1014, 1.442695
    %v1018 = vpow.pop %v1017
    %v1019 = vadd.f32 %v1016, 1.0
    %v1020 = vadd.f32 %v1018, 1.0
    %v1021 = vrcp.pop %v1019
    %v1022 = vmul.f32 %v1019, %v1021
    %v1023 = vsub.f32 1.0, %v1022
    %v1024 = vmul.f32 %v1021, %v1023
    %v1025 = vadd.f32 %v1021, %v1024
    %vm1026 = vweird.f32 %v1019
    %vm1027 = vweird.f32 %v1021
    %vm1028 = vmor %vm1026, %vm1027
    %v1029 = vsel %vm1028, %v1021, %v1025
    %v1030 = vand.u32 2147483647, %v1019
    %vm1031 = vcmp.eq.f32.partialorder %v1030, 8.507059e+37
    %v1032 = vand.u32 %v1019, 2147483648
    %v1033 = vor.u32 1.1754944e-38, %v1032
    %v1034 = vsel %vm1031, %v1033, %v1029
    %v1035 = vmul.f32 1.0, %v1034
    %v1036 = vrcp.pop %v1020
    %v1037 = vmul.f32 %v1020, %v1036
    %v1038 = vsub.f32 1.0, %v1037
    %v1039 = vmul.f32 %v1036, %v1038
    %v1040 = vadd.f32 %v1036, %v1039
    %vm1041 = vweird.f32 %v1020
    %vm1042 = vweird.f32 %v1036
    %vm1043 = vmor %vm1041, %vm1042
    %v1044 = vsel %vm1043, %v1036, %v1040
    %v1045 = vand.u32 2147483647, %v1020
    %vm1046 = vcmp.eq.f32.partialorder %v1045, 8.507059e+37
    %v1047 = vand.u32 %v1020, 2147483648
    %v1048 = vor.u32 1.1754944e-38, %v1047
    %v1049 = vsel %vm1046, %v1048, %v1044
    %v1050 = vmul.f32 1.0, %v1049
    %v1051 = vtanh.pop %v1011
    %v1052 = vtanh.pop %v1012
    %v1053 = vmul.f32 %v1035, %v971
    %v1054 = vmul.f32 %v1050, %v972
    %1057 = vrot.lane.b32.xlu0 %v1051, 32
    %v1058 = vpop.permute.xlu0 %1057
    %1059 = vrot.lane.b32.xlu0 %v1052, 32
    %v1060 = vpop.permute.xlu0 %1059
    %v1063 = vmul.f32 %v1035, %v1058
    %v1064 = vmul.f32 %v1050, %v1060
    %1067 = vrot.lane.b32.xlu0 %v1063, 32
    %v1068 = vpop.permute.xlu0 %1067
    %1069 = vrot.lane.b32.xlu0 %v1064, 32
    %v1070 = vpop.permute.xlu0 %1069
    %v1073 = vadd.f32 %v1053, %v1068
    %v1074 = vadd.f32 %v1054, %v1070
    %v1075 = vtanh.pop %v1073
    %v1076 = vtanh.pop %v1074
    %1079 = vrot.lane.b32.xlu0 %v1075, 32
    %v1080 = vpop.permute.xlu0 %1079
    %1081 = vrot.lane.b32.xlu0 %v1076, 32
    %v1082 = vpop.permute.xlu0 %1081
    %v1085 = vmul.f32 %v1035, %v1080
    %v1086 = vmul.f32 %v1050, %v1082
    %v1087 = vpack.c.bf16 %v1086, %v1085
    %1089 = vrot.lane.b32.xlu0 %v1087, 64
    %v1090 = vpop.permute.xlu0 %1089
    %v1092 = vsel %vm139, %v1090, 0
    %1094 = vmatpush.bf16.msra.mxu0 0
    %1095 = vmatpush.bf16.msra.mxu0 0
    %1096 = vmatpush.bf16.msra.mxu0 0
    %1097 = vmatpush.bf16.msra.mxu0 0
    %1098 = vmatpush.bf16.msra.mxu0 0
    %1099 = vmatpush.bf16.msra.mxu0 0
    %1100 = vmatpush.bf16.msra.mxu0 %v477
    %1101 = vmatpush.bf16.msra.mxu0 %v476
    %1102 = vmatmul.bf16.gmra.mxu0 %v1092
    %v1103 = vpop.f32.mrf.mxu0
    %v1104 = vadd.f32 %v466, %v1103
    %v1105 = vpop.f32.mrf.mxu0
    %v1106 = vadd.f32 %v466, %v1105
    %1107 = vdwg.mxu0
    %s1108 = scalar_lea.vmem [#allocation2], 48
    %v1109 = vld [vmem:[%s1108] sm:$0xf]
    %v1110 = vld [vmem:[%s1108 + $0x4] sm:$0xf]
    %v1111 = vunpack.c.l.bf16 %v1109
    %v1112 = vunpack.c.l.bf16 %v1110
    %v1113 = vadd.f32 %v1104, %v1111
    %v1114 = vadd.f32 %v1106, %v1112
    %v1115 = vxor.u32 %v1113, 2147483648
    %v1116 = vxor.u32 %v1114, 2147483648
    %v1117 = vmul.f32 %v1115, 1.442695
    %v1118 = vpow.pop %v1117
    %v1119 = vmul.f32 %v1116, 1.442695
    %v1120 = vpow.pop %v1119
    %v1121 = vadd.f32 %v1118, 1.0
    %v1122 = vadd.f32 %v1120, 1.0
    %v1123 = vrcp.pop %v1121
    %v1124 = vmul.f32 %v1121, %v1123
    %v1125 = vsub.f32 1.0, %v1124
    %v1126 = vmul.f32 %v1123, %v1125
    %v1127 = vadd.f32 %v1123, %v1126
    %vm1128 = vweird.f32 %v1121
    %vm1129 = vweird.f32 %v1123
    %vm1130 = vmor %vm1128, %vm1129
    %v1131 = vsel %vm1130, %v1123, %v1127
    %v1132 = vand.u32 2147483647, %v1121
    %vm1133 = vcmp.eq.f32.partialorder %v1132, 8.507059e+37
    %v1134 = vand.u32 %v1121, 2147483648
    %v1135 = vor.u32 1.1754944e-38, %v1134
    %v1136 = vsel %vm1133, %v1135, %v1131
    %v1137 = vmul.f32 1.0, %v1136
    %v1138 = vrcp.pop %v1122
    %v1139 = vmul.f32 %v1122, %v1138
    %v1140 = vsub.f32 1.0, %v1139
    %v1141 = vmul.f32 %v1138, %v1140
    %v1142 = vadd.f32 %v1138, %v1141
    %vm1143 = vweird.f32 %v1122
    %vm1144 = vweird.f32 %v1138
    %vm1145 = vmor %vm1143, %vm1144
    %v1146 = vsel %vm1145, %v1138, %v1142
    %v1147 = vand.u32 2147483647, %v1122
    %vm1148 = vcmp.eq.f32.partialorder %v1147, 8.507059e+37
    %v1149 = vand.u32 %v1122, 2147483648
    %v1150 = vor.u32 1.1754944e-38, %v1149
    %v1151 = vsel %vm1148, %v1150, %v1146
    %v1152 = vmul.f32 1.0, %v1151
    %v1153 = vtanh.pop %v1113
    %v1154 = vtanh.pop %v1114
    %v1155 = vmul.f32 %v1137, %v1073
    %v1156 = vmul.f32 %v1152, %v1074
    %1159 = vrot.lane.b32.xlu0 %v1153, 32
    %v1160 = vpop.permute.xlu0 %1159
    %1161 = vrot.lane.b32.xlu0 %v1154, 32
    %v1162 = vpop.permute.xlu0 %1161
    %v1165 = vmul.f32 %v1137, %v1160
    %v1166 = vmul.f32 %v1152, %v1162
    %1169 = vrot.lane.b32.xlu0 %v1165, 32
    %v1170 = vpop.permute.xlu0 %1169
    %1171 = vrot.lane.b32.xlu0 %v1166, 32
    %v1172 = vpop.permute.xlu0 %1171
    %v1175 = vadd.f32 %v1155, %v1170
    %v1176 = vadd.f32 %v1156, %v1172
    %v1177 = vtanh.pop %v1175
    %v1178 = vtanh.pop %v1176
    %1181 = vrot.lane.b32.xlu0 %v1177, 32
    %v1182 = vpop.permute.xlu0 %1181
    %1183 = vrot.lane.b32.xlu0 %v1178, 32
    %v1184 = vpop.permute.xlu0 %1183
    %v1187 = vmul.f32 %v1137, %v1182
    %v1188 = vmul.f32 %v1152, %v1184
    %v1189 = vpack.c.bf16 %v1188, %v1187
    %1191 = vrot.lane.b32.xlu0 %v1189, 64
    %v1192 = vpop.permute.xlu0 %1191
    %v1194 = vsel %vm139, %v1192, 0
    %1196 = vmatpush.bf16.msra.mxu0 0
    %1197 = vmatpush.bf16.msra.mxu0 0
    %1198 = vmatpush.bf16.msra.mxu0 0
    %1199 = vmatpush.bf16.msra.mxu0 0
    %1200 = vmatpush.bf16.msra.mxu0 0
    %1201 = vmatpush.bf16.msra.mxu0 0
    %1202 = vmatpush.bf16.msra.mxu0 %v477
    %1203 = vmatpush.bf16.msra.mxu0 %v476
    %1204 = vmatmul.bf16.gmra.mxu0 %v1194
    %v1205 = vpop.f32.mrf.mxu0
    %v1206 = vadd.f32 %v466, %v1205
    %v1207 = vpop.f32.mrf.mxu0
    %v1208 = vadd.f32 %v466, %v1207
    %1209 = vdwg.mxu0
    %s1210 = scalar_lea.vmem [#allocation2], 56
    %v1211 = vld [vmem:[%s1210] sm:$0xf]
    %v1212 = vld [vmem:[%s1210 + $0x4] sm:$0xf]
    %v1213 = vunpack.c.l.bf16 %v1211
    %v1214 = vunpack.c.l.bf16 %v1212
    %v1215 = vadd.f32 %v1206, %v1213
    %v1216 = vadd.f32 %v1208, %v1214
    %v1217 = vxor.u32 %v1215, 2147483648
    %v1218 = vxor.u32 %v1216, 2147483648
    %v1219 = vmul.f32 %v1217, 1.442695
    %v1220 = vpow.pop %v1219
    %v1221 = vmul.f32 %v1218, 1.442695
    %v1222 = vpow.pop %v1221
    %v1223 = vadd.f32 %v1220, 1.0
    %v1224 = vadd.f32 %v1222, 1.0
    %v1225 = vrcp.pop %v1223
    %v1226 = vmul.f32 %v1223, %v1225
    %v1227 = vsub.f32 1.0, %v1226
    %v1228 = vmul.f32 %v1225, %v1227
    %v1229 = vadd.f32 %v1225, %v1228
    %vm1230 = vweird.f32 %v1223
    %vm1231 = vweird.f32 %v1225
    %vm1232 = vmor %vm1230, %vm1231
    %v1233 = vsel %vm1232, %v1225, %v1229
    %v1234 = vand.u32 2147483647, %v1223
    %vm1235 = vcmp.eq.f32.partialorder %v1234, 8.507059e+37
    %v1236 = vand.u32 %v1223, 2147483648
    %v1237 = vor.u32 1.1754944e-38, %v1236
    %v1238 = vsel %vm1235, %v1237, %v1233
    %v1239 = vmul.f32 1.0, %v1238
    %v1240 = vrcp.pop %v1224
    %v1241 = vmul.f32 %v1224, %v1240
    %v1242 = vsub.f32 1.0, %v1241
    %v1243 = vmul.f32 %v1240, %v1242
    %v1244 = vadd.f32 %v1240, %v1243
    %vm1245 = vweird.f32 %v1224
    %vm1246 = vweird.f32 %v1240
    %vm1247 = vmor %vm1245, %vm1246
    %v1248 = vsel %vm1247, %v1240, %v1244
    %v1249 = vand.u32 2147483647, %v1224
    %vm1250 = vcmp.eq.f32.partialorder %v1249, 8.507059e+37
    %v1251 = vand.u32 %v1224, 2147483648
    %v1252 = vor.u32 1.1754944e-38, %v1251
    %v1253 = vsel %vm1250, %v1252, %v1248
    %v1254 = vmul.f32 1.0, %v1253
    %v1255 = vtanh.pop %v1215
    %v1256 = vtanh.pop %v1216
    %v1257 = vmul.f32 %v1239, %v1175
    %v1258 = vmul.f32 %v1254, %v1176
    %1261 = vrot.lane.b32.xlu0 %v1255, 32
    %v1262 = vpop.permute.xlu0 %1261
    %1263 = vrot.lane.b32.xlu0 %v1256, 32
    %v1264 = vpop.permute.xlu0 %1263
    %v1267 = vmul.f32 %v1239, %v1262
    %v1268 = vmul.f32 %v1254, %v1264
    %1271 = vrot.lane.b32.xlu0 %v1267, 32
    %v1272 = vpop.permute.xlu0 %1271
    %1273 = vrot.lane.b32.xlu0 %v1268, 32
    %v1274 = vpop.permute.xlu0 %1273
    %v1277 = vadd.f32 %v1257, %v1272
    %v1278 = vadd.f32 %v1258, %v1274
    %v1279 = vtanh.pop %v1277
    %v1280 = vtanh.pop %v1278
    %1283 = vrot.lane.b32.xlu0 %v1279, 32
    %v1284 = vpop.permute.xlu0 %1283
    %1285 = vrot.lane.b32.xlu0 %v1280, 32
    %v1286 = vpop.permute.xlu0 %1285
    %v1289 = vmul.f32 %v1239, %v1284
    %v1290 = vmul.f32 %v1254, %v1286
    %v1291 = vpack.c.bf16 %v1289, %v1289
    %v1292 = vpack.c.bf16 %v1290, %v1290
    %v1293 = vunpack.c.l.bf16 %v1291
    %v1294 = vunpack.c.l.bf16 %v1292
    %v1295 = vmax.f32 %v1293, 0.0
    %v1296 = vmax.f32 %v1294, 0.0
    %v1297 = vpack.c.bf16 %v1296, %v1295
    %v1298 = vld [vmem:[%s6] sm:$0xf]
    %v1299 = vld [vmem:[%s6 + $0x4] sm:$0xf]
    %v1300 = vld [vmem:[%s6 + $0x8] sm:$0xf]
    %v1301 = vld [vmem:[%s6 + $0xc] sm:$0xf]
    %v1302 = vld [vmem:[%s7] sm:$0x1]
    %v1304 = vperm.slane %v1302, 0
    %1307 = vrot.lane.b32.xlu0 %v1297, 64
    %v1308 = vpop.permute.xlu0 %1307
    %v1313 = vunpack.c.l.b16 %v1298
    %v1314 = vunpack.c.l.b16 %v1299
    %v1315 = vunpack.c.l.b16 %v1300
    %v1316 = vunpack.c.l.b16 %v1301
    %v1317 = vpack.c.b16 %v1314, %v1313
    %v1318 = vpack.c.b16 %v1316, %v1315
    %v1322 = vsel %vm139, %v1308, 0
    %1324 = vmatpush.bf16.msra.mxu0 0
    %1325 = vmatpush.bf16.msra.mxu0 0
    %1326 = vmatpush.bf16.msra.mxu0 0
    %1327 = vmatpush.bf16.msra.mxu0 0
    %1328 = vmatpush.bf16.msra.mxu0 0
    %1329 = vmatpush.bf16.msra.mxu0 0
    %1330 = vmatpush.bf16.msra.mxu0 %v1318
    %1331 = vmatpush.bf16.msra.mxu0 %v1317
    %1332 = vmatmul.bf16.gmra.mxu0 %v1322
    %v1333 = vpop.f32.mrf.mxu0
    %v1334 = vadd.f32 %v1304, %v1333
    %v1335 = vpop.f32.mrf.mxu0
    %v1336 = vadd.f32 %v1304, %v1335
    %1337 = vdwg.mxu0
    %vm1338 = vcmp.gt.f32.partialorder %v1334, 0.0
    %vm1339 = vcmp.gt.f32.partialorder %v1336, 0.0
    %v1340 = vmul.f32 %v1334, 0.01
    %v1341 = vmul.f32 %v1336, 0.01
    %v1342 = vsel %vm1338, %v1334, %v1340
    %v1343 = vsel %vm1339, %v1336, %v1341
    %v1344 = vpack.c.bf16 %v1343, %v1342
    %v1345 = vld [vmem:[%s8] sm:$0xf]
    %v1346 = vld [vmem:[%s8 + $0x4] sm:$0xf]
    %v1347 = vld [vmem:[%s8 + $0x8] sm:$0xf]
    %v1348 = vld [vmem:[%s8 + $0xc] sm:$0xf]
    %v1349 = vld [vmem:[%s9] sm:$0x1]
    %v1351 = vperm.slane %v1349, 0
    %v1357 = vunpack.c.l.b16 %v1345
    %v1358 = vunpack.c.l.b16 %v1346
    %v1359 = vunpack.c.l.b16 %v1347
    %v1360 = vunpack.c.l.b16 %v1348
    %v1361 = vpack.c.b16 %v1358, %v1357
    %v1362 = vpack.c.b16 %v1360, %v1359
    %v1366 = vsel %vm139, %v1344, 0
    %1368 = vmatpush.bf16.msra.mxu0 0
    %1369 = vmatpush.bf16.msra.mxu0 0
    %1370 = vmatpush.bf16.msra.mxu0 0
    %1371 = vmatpush.bf16.msra.mxu0 0
    %1372 = vmatpush.bf16.msra.mxu0 0
    %1373 = vmatpush.bf16.msra.mxu0 0
    %1374 = vmatpush.bf16.msra.mxu0 %v1362
    %1375 = vmatpush.bf16.msra.mxu0 %v1361
    %1376 = vmatmul.bf16.gmra.mxu0 %v1366
    %v1377 = vpop.f32.mrf.mxu0
    %v1378 = vadd.f32 %v1351, %v1377
    %v1379 = vpop.f32.mrf.mxu0
    %v1380 = vadd.f32 %v1351, %v1379
    %1381 = vdwg.mxu0
    %1382 = vmax.xlane.f32.xlu0 %v1378
    %v1383 = vpop.xlane.xlu0 %1382
    %1384 = vmax.xlane.f32.xlu0 %v1380
    %v1385 = vpop.xlane.xlu0 %1384
    %v1386 = vsub.f32 %v1378, %v1383
    %v1387 = vsub.f32 %v1380, %v1385
    %v1388 = vmul.f32 %v1386, 1.442695
    %v1389 = vpow.pop %v1388
    %v1390 = vmul.f32 %v1387, 1.442695
    %v1391 = vpow.pop %v1390
    %1392 = vadd.xlane.f32.xlu0 %v1389
    %v1393 = vpop.xlane.xlu0 %1392
    %1394 = vadd.xlane.f32.xlu0 %v1391
    %v1395 = vpop.xlane.xlu0 %1394
    %v1396 = vrcp.pop %v1393
    %v1397 = vmul.f32 %v1393, %v1396
    %v1398 = vsub.f32 1.0, %v1397
    %v1399 = vmul.f32 %v1396, %v1398
    %v1400 = vadd.f32 %v1396, %v1399
    %vm1401 = vweird.f32 %v1393
    %vm1402 = vweird.f32 %v1396
    %vm1403 = vmor %vm1401, %vm1402
    %v1404 = vsel %vm1403, %v1396, %v1400
    %v1405 = vand.u32 2147483647, %v1393
    %vm1406 = vcmp.eq.f32.partialorder %v1405, 8.507059e+37
    %v1407 = vand.u32 %v1393, 2147483648
    %v1408 = vor.u32 1.1754944e-38, %v1407
    %v1409 = vsel %vm1406, %v1408, %v1404
    %v1410 = vmul.f32 %v1389, %v1409
    %v1411 = vrcp.pop %v1395
    %v1412 = vmul.f32 %v1395, %v1411
    %v1413 = vsub.f32 1.0, %v1412
    %v1414 = vmul.f32 %v1411, %v1413
    %v1415 = vadd.f32 %v1411, %v1414
    %vm1416 = vweird.f32 %v1395
    %vm1417 = vweird.f32 %v1411
    %vm1418 = vmor %vm1416, %vm1417
    %v1419 = vsel %vm1418, %v1411, %v1415
    %v1420 = vand.u32 2147483647, %v1395
    %vm1421 = vcmp.eq.f32.partialorder %v1420, 8.507059e+37
    %v1422 = vand.u32 %v1395, 2147483648
    %v1423 = vor.u32 1.1754944e-38, %v1422
    %v1424 = vsel %vm1421, %v1423, %v1419
    %v1425 = vmul.f32 %v1391, %v1424
    %1426 = vst [vmem:[#allocation3] sm:$0xff] %v1410
    %1427 = vst [vmem:[#allocation3 + $0x8] sm:$0xff] %v1425
    // Predicated region
    $region42: #{tpu_custom_call.1} parent=1 // pred_check
      _
    $region43: #{tpu_custom_call.1} parent=1 // pred_check_branch
      %1429 = sbr.rel (0) target = $region45
    $region44: #{tpu_custom_call.1} parent=1 // pred_region
      %1431 = vsyncadd [#allocation4], 0
      %s1432 = sshll.u32 [#allocation3], 4
      %s1433 = int_to_ptr.vmem [resolvable:$true] %s1432
      %s1434 = sshll.u32 %s10, 4
      %s1435 = int_to_ptr.hbm [resolvable:$true] %s1434
      %1440 = dma.vmem_to_hbm [thread:$0]  %s1433, 256, %s1435, [#allocation4], 128, 128, 8
    $region45: #{tpu_custom_call.1} parent=1 // pred_fallthru
      _
    // Predicated region
    $region46: #{tpu_custom_call.1} parent=1 // pred_check
      _
    $region47: #{tpu_custom_call.1} parent=1 // pred_check_branch
      %1442 = sbr.rel (0) target = $region49
    $region48: #{tpu_custom_call.1} parent=1 // pred_region
      %1444 = dma.done [#allocation4], 256
    $region49: #{tpu_custom_call.1} parent=1 // pred_fallthru
      _
    %1445 = vsyncpa [#allocation4], 1

</llo_original>
